<compile_context>
chip_gen: v7x
topology: tpu7x:2x2x1
jax: 0.10.0
libtpu: 0.0.40
codegen_flags: <defaults>
</compile_context>

<pallas_src>
import functools

import jax
import jax.numpy as jnp
import numpy as np
from jax import lax
from jax.experimental import pallas as pl
from jax.experimental.pallas import tpu as pltpu


# ------------------------------- fused kernel --------------------------------
def adver_nce_time_kernel(seq_ref, len_ref, tgt_ref, gum_ref, tseq_ref, tint_ref,
                          ttime_ref, ep_ref, eq_ref, wt_ref,
                          ll_ref, se_ref, ng_ref, ag_ref, *, K, granularity):
    items = seq_ref[...]                      # [TB, L] int32
    lens_i = len_ref[...]                     # [TB, 1] int32
    tgt = tgt_ref[...]                        # [TB, 1] int32
    gum = gum_ref[...]                        # [TB, V] f32  (Gumbel noise)
    tseq = tseq_ref[...]                      # [TB, L] f32
    tint = tint_ref[...]                      # [TB, L] f32
    ttime = ttime_ref[...]                    # [TB, 1] f32
    Ep = ep_ref[...]                          # [V, D]  f32
    Eq = eq_ref[...]                          # [V, D]  f32
    wt = wt_ref[...]                          # [1, D]  f32

    TB, L = items.shape
    V = Ep.shape[0]
    K1 = K + 1

    lens = lens_i.astype(jnp.float32)
    inv_len = 1.0 / lens                                       # len >= 1 assumed
    lpos = lax.broadcasted_iota(jnp.int32, (TB, L), 1)
    seq_mask = (lpos < lens_i).astype(jnp.float32)             # [TB, L]
    viota = lax.broadcasted_iota(jnp.int32, (TB, V), 1)        # [TB, V]

    # ---- length-normalized bag-of-items S: mean-pooling becomes an MXU matmul ----
    S = jnp.zeros((TB, V), jnp.float32)
    for t in range(L):                                         # L is small & static
        hit = (viota == items[:, t:t + 1]).astype(jnp.float32)
        S = S + hit * seq_mask[:, t:t + 1]
    S = S * inv_len                                            # [TB, V]

    # ---- tied-embedding encoders: bf16 MXU operands, f32 accumulation ----
    S16 = S.astype(jnp.bfloat16)
    Ep16 = Ep.astype(jnp.bfloat16)
    Eq16 = Eq.astype(jnp.bfloat16)
    h_p = jnp.dot(S16, Ep16, preferred_element_type=jnp.float32)    # [TB, D]
    h_q = jnp.dot(S16, Eq16, preferred_element_type=jnp.float32)    # [TB, D]
    dn = (((1,), (1,)), ((), ()))                                   # contract last dims: h @ E.T
    logits_p = lax.dot_general(h_p.astype(jnp.bfloat16), Ep16, dn,
                               preferred_element_type=jnp.float32)  # [TB, V]
    logits_q = lax.dot_general(h_q.astype(jnp.bfloat16), Eq16, dn,
                               preferred_element_type=jnp.float32)  # [TB, V]

    # ---- sampling: multinomial w/o replacement == Gumbel top-K on masked noise logits ----
    NEG = jnp.float32(-1e30)
    tgt_sel = viota == tgt                                      # one-hot at target column
    scores = jnp.where(tgt_sel, NEG, logits_q + gum)

    def gather(sel, col):                                       # static column stores
        ng_ref[:, col:col + 1] = jnp.sum(jnp.where(sel, logits_q, 0.0), axis=1, keepdims=True)
        ag_ref[:, col:col + 1] = jnp.sum(jnp.where(sel, logits_p, 0.0), axis=1, keepdims=True)

    gather(tgt_sel, 0)                                          # column 0: the target item
    work = scores
    for k in range(1, K1):                                      # columns 1..K: sampled negatives
        m = jnp.max(work, axis=1, keepdims=True)
        idx = jnp.min(jnp.where(work == m, viota, V), axis=1, keepdims=True)
        sel = viota == idx
        gather(sel, k)
        work = jnp.where(sel, NEG, work)

    noise_g = ng_ref[...]                                       # [TB, K+1]
    actual_g = ag_ref[...]

    def softmax(x):
        x = x - jnp.max(x, axis=1, keepdims=True)
        e = jnp.exp(x)
        return e / jnp.sum(e, axis=1, keepdims=True)

    noise_p = softmax(noise_g)
    actual_p = softmax(actual_g)
    deno = K * noise_p + actual_p + 1e-6
    tmp1 = actual_p / deno
    tmp2 = noise_p / deno
    kiota = lax.broadcasted_iota(jnp.int32, (TB, K1), 1)
    likeli = jnp.where(kiota == 0, tmp1, tmp2)                  # cat(tmp1[:, :1], tmp2[:, 1:])
    ll_sum = jnp.sum(jnp.log(likeli))                           # block partial sum

    # ---- time head (p_model) + MSE partial ----
    predict_intervals = (jnp.sum(h_p * wt, axis=1, keepdims=True)
                         + jnp.sum(tint * seq_mask, axis=1, keepdims=True) * inv_len)
    last_sel = (lpos == (lens_i - 1)).astype(jnp.float32)
    last_time = jnp.sum(tseq * last_sel, axis=1, keepdims=True)
    target_interval = ttime - last_time
    diff = (predict_intervals - target_interval) / jnp.float32(granularity)
    se_sum = jnp.sum(diff * diff)

    ll_ref[...] = ll_sum * jnp.ones((1, 1, 1), jnp.float32)
    se_ref[...] = se_sum * jnp.ones((1, 1, 1), jnp.float32)


# --------------------------------- wrapper ------------------------------------
def _maybe_compiler_params():
    cls = getattr(pltpu, "CompilerParams", None) or getattr(pltpu, "TPUCompilerParams", None)
    if cls is None:
        return {}
    return {"compiler_params": cls(dimension_semantics=("parallel",))}


def adver_nce_time_forward(E_p, E_q, w_time, item_seq, item_seq_len, target_id,
                           time_seq, time_interval_seq, target_time, gumbel_noise,
                           K, granularity=24 * 30 * 6, block_b=8):
    B, L = item_seq.shape
    V, D = E_p.shape
    assert B % block_b == 0, "batch must be a multiple of the batch tile"
    nb = B // block_b
    TB = block_b

    kern = functools.partial(adver_nce_time_kernel, K=K, granularity=float(granularity))

    ll, se = pl.pallas_call(
        kern,
        out_shape=(jax.ShapeDtypeStruct((nb, 1, 1), jnp.float32),
                   jax.ShapeDtypeStruct((nb, 1, 1), jnp.float32)),
        grid=(nb,),
        in_specs=[
            pl.BlockSpec((TB, L), lambda b: (b, 0)),          # item_seq
            pl.BlockSpec((TB, 1), lambda b: (b, 0)),          # item_seq_len
            pl.BlockSpec((TB, 1), lambda b: (b, 0)),          # target_id
            pl.BlockSpec((TB, V), lambda b: (b, 0)),          # gumbel noise
            pl.BlockSpec((TB, L), lambda b: (b, 0)),          # time_seq
            pl.BlockSpec((TB, L), lambda b: (b, 0)),          # time_interval_seq
            pl.BlockSpec((TB, 1), lambda b: (b, 0)),          # target_time
            pl.BlockSpec((V, D), lambda b: (0, 0)),           # E_p  (resident across blocks)
            pl.BlockSpec((V, D), lambda b: (0, 0)),           # E_q  (resident across blocks)
            pl.BlockSpec((1, D), lambda b: (0, 0)),           # w_time (resident)
        ],
        out_specs=(pl.BlockSpec((1, 1, 1), lambda b: (b, 0, 0)),
                   pl.BlockSpec((1, 1, 1), lambda b: (b, 0, 0))),
        scratch_shapes=[pltpu.VMEM((TB, K + 1), jnp.float32),   # gathered noise logits
                        pltpu.VMEM((TB, K + 1), jnp.float32)],  # gathered actual logits
        **_maybe_compiler_params(),
    )(item_seq,
      item_seq_len.astype(jnp.int32)[:, None],
      target_id.astype(jnp.int32)[:, None],
      gumbel_noise,
      time_seq,
      time_interval_seq,
      target_time.astype(jnp.float32)[:, None],
      E_p, E_q, w_time)

    type_loss = -jnp.sum(ll) / (B * (K + 1))
    time_loss = jnp.sum(se) / B / 5.0
    return type_loss + time_loss


# ------------------------------ pure-JAX reference ----------------------------
def ref_forward(E_p, E_q, w_time, item_seq, item_seq_len, target_id,
                time_seq, time_interval_seq, target_time, gumbel_noise, K,
                granularity=24 * 30 * 6):
    B, L = item_seq.shape
    V, D = E_p.shape
    lens_i = item_seq_len.astype(jnp.int32)[:, None]
    lens = lens_i.astype(jnp.float32)
    seq_mask = (jnp.arange(L)[None, :] < lens_i).astype(jnp.float32)
    S = jnp.sum(jax.nn.one_hot(item_seq, V, dtype=jnp.float32) * seq_mask[:, :, None],
                axis=1) / lens

    def encode(E):
        S16 = S.astype(jnp.bfloat16)
        E16 = E.astype(jnp.bfloat16)
        h = jnp.dot(S16, E16, preferred_element_type=jnp.float32)
        logits = lax.dot_general(h.astype(jnp.bfloat16), E16, (((1,), (1,)), ((), ())),
                                 preferred_element_type=jnp.float32)
        return h, logits

    h_p, logits_p = encode(E_p)
    _, logits_q = encode(E_q)

    NEG = jnp.float32(-1e30)
    tgt_sel = jnp.arange(V)[None, :] == target_id[:, None]
    scores = jnp.where(tgt_sel, NEG, logits_q + gumbel_noise)
    _, neg_idx = jax.lax.top_k(scores, K)                     # Gumbel top-K sampling
    idx = jnp.concatenate([target_id[:, None], neg_idx], axis=1)

    noise_g = jnp.take_along_axis(logits_q, idx, axis=1)
    actual_g = jnp.take_along_axis(logits_p, idx, axis=1)

    def softmax(x):
        x = x - jnp.max(x, axis=1, keepdims=True)
        e = jnp.exp(x)
        return e / jnp.sum(e, axis=1, keepdims=True)

    noise_p = softmax(noise_g)
    actual_p = softmax(actual_g)
    deno = K * noise_p + actual_p + 1e-6
    tmp1 = actual_p / deno
    tmp2 = noise_p / deno
    likeli = jnp.concatenate([tmp1[:, :1], tmp2[:, 1:]], axis=1)
    type_loss = -jnp.mean(jnp.log(likeli))

    predict_intervals = (jnp.sum(h_p * w_time, axis=1, keepdims=True)
                         + jnp.sum(time_interval_seq * seq_mask, axis=1, keepdims=True) / lens)
    last_time = jnp.take_along_axis(time_seq, lens_i - 1, axis=1)
    target_interval = target_time.astype(jnp.float32)[:, None] - last_time
    time_loss = jnp.mean(((predict_intervals - target_interval) / float(granularity)) ** 2) / 5.0
    return type_loss + time_loss


# ------------------------------------- main ------------------------------------
if __name__ == "__main__":
    B, L, D, V, K = 16, 8, 32, 128, 5     # B=16 with batch tile 8 -> 2-step parallel grid

    key = jax.random.PRNGKey(0)
    k_ep, k_eq, k_wt, k_seq, k_len, k_tgt, k_t, k_tt, k_g = jax.random.split(key, 9)

    E_p = jax.random.normal(k_ep, (V, D), dtype=jnp.float32) * 0.1   # p_model embedding
    E_q = jax.random.normal(k_eq, (V, D), dtype=jnp.float32) * 0.1   # q_model embedding
    w_time = jax.random.normal(k_wt, (1, D), dtype=jnp.float32) * 0.1

    item_seq = jax.random.randint(k_seq, (B, L), 0, V, dtype=jnp.int32)
    item_seq_len = jax.random.randint(k_len, (B,), 1, L + 1, dtype=jnp.int32)
    target_id = jax.random.randint(k_tgt, (B,), 0, V, dtype=jnp.int32)

    intervals = jax.random.uniform(k_t, (B, L), dtype=jnp.float32, minval=1.0, maxval=48.0)
    time_seq = jnp.cumsum(intervals, axis=1)
    time_interval_seq = intervals
    target_time = time_seq[:, -1] + jax.random.uniform(k_tt, (B,), dtype=jnp.float32,
                                                       minval=1.0, maxval=48.0)

    # Gumbel noise for sampling-without-replacement (shared by kernel & reference).
    gumbel_noise = jax.random.gumbel(k_g, (B, V), dtype=jnp.float32)

    loss = adver_nce_time_forward(E_p, E_q, w_time, item_seq, item_seq_len, target_id,
                                  time_seq, time_interval_seq, target_time, gumbel_noise, K)
    loss = jax.block_until_ready(loss)

    loss_ref = jax.block_until_ready(
        ref_forward(E_p, E_q, w_time, item_seq, item_seq_len, target_id,
                    time_seq, time_interval_seq, target_time, gumbel_noise, K))

    np.testing.assert_allclose(np.asarray(loss), np.asarray(loss_ref), rtol=2e-3, atol=1e-4)
    print("KERNEL_OK")
</pallas_src>

<mosaic_0001>
module attributes {stable_mosaic.version = 11 : i64} {
  func.func @adver_nce_time_kernel(%arg0: i32, %arg1: memref<8x8xi32, #tpu.memory_space<vmem>>, %arg2: memref<8x1xi32, #tpu.memory_space<vmem>>, %arg3: memref<8x1xi32, #tpu.memory_space<vmem>>, %arg4: memref<8x128xf32, #tpu.memory_space<vmem>>, %arg5: memref<8x8xf32, #tpu.memory_space<vmem>>, %arg6: memref<8x8xf32, #tpu.memory_space<vmem>>, %arg7: memref<8x1xf32, #tpu.memory_space<vmem>>, %arg8: memref<128x32xf32, #tpu.memory_space<vmem>>, %arg9: memref<128x32xf32, #tpu.memory_space<vmem>>, %arg10: memref<1x32xf32, #tpu.memory_space<vmem>>, %arg11: memref<1x1x1xf32, #tpu.memory_space<vmem>>, %arg12: memref<1x1x1xf32, #tpu.memory_space<vmem>>, %arg13: memref<8x6xf32, #tpu.memory_space<vmem>>, %arg14: memref<8x6xf32, #tpu.memory_space<vmem>>) attributes {dimension_semantics = [#tpu.dimension_semantics<parallel>], iteration_bounds = array<i64: 2>, scalar_prefetch = 0 : i64, scratch_operands = 2 : i64, tpu.core_type = #tpu.core_type<tc>, window_params = [{transform_indices = @transform_0, window_bounds = array<i64: 8, 8>}, {transform_indices = @transform_1, window_bounds = array<i64: 8, 1>}, {transform_indices = @transform_2, window_bounds = array<i64: 8, 1>}, {transform_indices = @transform_3, window_bounds = array<i64: 8, 128>}, {transform_indices = @transform_4, window_bounds = array<i64: 8, 8>}, {transform_indices = @transform_5, window_bounds = array<i64: 8, 8>}, {transform_indices = @transform_6, window_bounds = array<i64: 8, 1>}, {pipeline_mode = #tpu.pipeline_mode<synchronous>, transform_indices = @transform_7, window_bounds = array<i64: 128, 32>}, {pipeline_mode = #tpu.pipeline_mode<synchronous>, transform_indices = @transform_8, window_bounds = array<i64: 128, 32>}, {pipeline_mode = #tpu.pipeline_mode<synchronous>, transform_indices = @transform_9, window_bounds = array<i64: 1, 32>}, {transform_indices = @transform_10, window_bounds = array<i64: 1, 1, 1>}, {transform_indices = @transform_11, window_bounds = array<i64: 1, 1, 1>}]} {
    %c0 = arith.constant 0 : index
    %c0_0 = arith.constant 0 : index
    %0 = vector.load %arg1[%c0, %c0_0] : memref<8x8xi32, #tpu.memory_space<vmem>>, vector<8x8xi32>
    %c0_1 = arith.constant 0 : index
    %c0_2 = arith.constant 0 : index
    %1 = vector.load %arg2[%c0_1, %c0_2] : memref<8x1xi32, #tpu.memory_space<vmem>>, vector<8x1xi32>
    %c0_3 = arith.constant 0 : index
    %c0_4 = arith.constant 0 : index
    %2 = vector.load %arg3[%c0_3, %c0_4] : memref<8x1xi32, #tpu.memory_space<vmem>>, vector<8x1xi32>
    %c0_5 = arith.constant 0 : index
    %c0_6 = arith.constant 0 : index
    %3 = vector.load %arg4[%c0_5, %c0_6] : memref<8x128xf32, #tpu.memory_space<vmem>>, vector<8x128xf32>
    %c0_7 = arith.constant 0 : index
    %c0_8 = arith.constant 0 : index
    %4 = vector.load %arg5[%c0_7, %c0_8] : memref<8x8xf32, #tpu.memory_space<vmem>>, vector<8x8xf32>
    %c0_9 = arith.constant 0 : index
    %c0_10 = arith.constant 0 : index
    %5 = vector.load %arg6[%c0_9, %c0_10] : memref<8x8xf32, #tpu.memory_space<vmem>>, vector<8x8xf32>
    %c0_11 = arith.constant 0 : index
    %c0_12 = arith.constant 0 : index
    %6 = vector.load %arg7[%c0_11, %c0_12] : memref<8x1xf32, #tpu.memory_space<vmem>>, vector<8x1xf32>
    %c0_13 = arith.constant 0 : index
    %c0_14 = arith.constant 0 : index
    %7 = vector.load %arg8[%c0_13, %c0_14] : memref<128x32xf32, #tpu.memory_space<vmem>>, vector<128x32xf32>
    %c0_15 = arith.constant 0 : index
    %c0_16 = arith.constant 0 : index
    %8 = vector.load %arg9[%c0_15, %c0_16] : memref<128x32xf32, #tpu.memory_space<vmem>>, vector<128x32xf32>
    %c0_17 = arith.constant 0 : index
    %c0_18 = arith.constant 0 : index
    %9 = vector.load %arg10[%c0_17, %c0_18] : memref<1x32xf32, #tpu.memory_space<vmem>>, vector<1x32xf32>
    %10 = arith.sitofp %1 : vector<8x1xi32> to vector<8x1xf32>
    %cst = arith.constant 1.000000e+00 : f32
    %11 = vector.broadcast %cst : f32 to vector<8x1xf32>
    %12 = arith.divf %11, %10 : vector<8x1xf32>
    %13 = tpu.iota {dimensions = array<i32: 1>} : vector<8x8xi32>
    %14 = vector.broadcast %1 : vector<8x1xi32> to vector<8x8xi32>
    %15 = arith.cmpi slt, %13, %14 : vector<8x8xi32>
    %16 = arith.extui %15 : vector<8x8xi1> to vector<8x8xi32>
    %17 = arith.sitofp %16 : vector<8x8xi32> to vector<8x8xf32>
    %18 = tpu.iota {dimensions = array<i32: 1>} : vector<8x128xi32>
    %cst_19 = arith.constant 0.000000e+00 : f32
    %19 = vector.broadcast %cst_19 : f32 to vector<8x128xf32>
    %20 = vector.extract_strided_slice %0 {offsets = [0, 0], sizes = [8, 1], strides = [1, 1]} : vector<8x8xi32> to vector<8x1xi32>
    %21 = vector.broadcast %20 : vector<8x1xi32> to vector<8x128xi32>
    %22 = arith.cmpi eq, %18, %21 : vector<8x128xi32>
    %23 = arith.extui %22 : vector<8x128xi1> to vector<8x128xi32>
    %24 = arith.sitofp %23 : vector<8x128xi32> to vector<8x128xf32>
    %25 = vector.extract_strided_slice %17 {offsets = [0, 0], sizes = [8, 1], strides = [1, 1]} : vector<8x8xf32> to vector<8x1xf32>
    %26 = vector.broadcast %25 : vector<8x1xf32> to vector<8x128xf32>
    %27 = arith.mulf %24, %26 : vector<8x128xf32>
    %28 = arith.addf %19, %27 : vector<8x128xf32>
    %29 = vector.extract_strided_slice %0 {offsets = [0, 1], sizes = [8, 1], strides = [1, 1]} : vector<8x8xi32> to vector<8x1xi32>
    %30 = vector.broadcast %29 : vector<8x1xi32> to vector<8x128xi32>
    %31 = arith.cmpi eq, %18, %30 : vector<8x128xi32>
    %32 = arith.extui %31 : vector<8x128xi1> to vector<8x128xi32>
    %33 = arith.sitofp %32 : vector<8x128xi32> to vector<8x128xf32>
    %34 = vector.extract_strided_slice %17 {offsets = [0, 1], sizes = [8, 1], strides = [1, 1]} : vector<8x8xf32> to vector<8x1xf32>
    %35 = vector.broadcast %34 : vector<8x1xf32> to vector<8x128xf32>
    %36 = arith.mulf %33, %35 : vector<8x128xf32>
    %37 = arith.addf %28, %36 : vector<8x128xf32>
    %38 = vector.extract_strided_slice %0 {offsets = [0, 2], sizes = [8, 1], strides = [1, 1]} : vector<8x8xi32> to vector<8x1xi32>
    %39 = vector.broadcast %38 : vector<8x1xi32> to vector<8x128xi32>
    %40 = arith.cmpi eq, %18, %39 : vector<8x128xi32>
    %41 = arith.extui %40 : vector<8x128xi1> to vector<8x128xi32>
    %42 = arith.sitofp %41 : vector<8x128xi32> to vector<8x128xf32>
    %43 = vector.extract_strided_slice %17 {offsets = [0, 2], sizes = [8, 1], strides = [1, 1]} : vector<8x8xf32> to vector<8x1xf32>
    %44 = vector.broadcast %43 : vector<8x1xf32> to vector<8x128xf32>
    %45 = arith.mulf %42, %44 : vector<8x128xf32>
    %46 = arith.addf %37, %45 : vector<8x128xf32>
    %47 = vector.extract_strided_slice %0 {offsets = [0, 3], sizes = [8, 1], strides = [1, 1]} : vector<8x8xi32> to vector<8x1xi32>
    %48 = vector.broadcast %47 : vector<8x1xi32> to vector<8x128xi32>
    %49 = arith.cmpi eq, %18, %48 : vector<8x128xi32>
    %50 = arith.extui %49 : vector<8x128xi1> to vector<8x128xi32>
    %51 = arith.sitofp %50 : vector<8x128xi32> to vector<8x128xf32>
    %52 = vector.extract_strided_slice %17 {offsets = [0, 3], sizes = [8, 1], strides = [1, 1]} : vector<8x8xf32> to vector<8x1xf32>
    %53 = vector.broadcast %52 : vector<8x1xf32> to vector<8x128xf32>
    %54 = arith.mulf %51, %53 : vector<8x128xf32>
    %55 = arith.addf %46, %54 : vector<8x128xf32>
    %56 = vector.extract_strided_slice %0 {offsets = [0, 4], sizes = [8, 1], strides = [1, 1]} : vector<8x8xi32> to vector<8x1xi32>
    %57 = vector.broadcast %56 : vector<8x1xi32> to vector<8x128xi32>
    %58 = arith.cmpi eq, %18, %57 : vector<8x128xi32>
    %59 = arith.extui %58 : vector<8x128xi1> to vector<8x128xi32>
    %60 = arith.sitofp %59 : vector<8x128xi32> to vector<8x128xf32>
    %61 = vector.extract_strided_slice %17 {offsets = [0, 4], sizes = [8, 1], strides = [1, 1]} : vector<8x8xf32> to vector<8x1xf32>
    %62 = vector.broadcast %61 : vector<8x1xf32> to vector<8x128xf32>
    %63 = arith.mulf %60, %62 : vector<8x128xf32>
    %64 = arith.addf %55, %63 : vector<8x128xf32>
    %65 = vector.extract_strided_slice %0 {offsets = [0, 5], sizes = [8, 1], strides = [1, 1]} : vector<8x8xi32> to vector<8x1xi32>
    %66 = vector.broadcast %65 : vector<8x1xi32> to vector<8x128xi32>
    %67 = arith.cmpi eq, %18, %66 : vector<8x128xi32>
    %68 = arith.extui %67 : vector<8x128xi1> to vector<8x128xi32>
    %69 = arith.sitofp %68 : vector<8x128xi32> to vector<8x128xf32>
    %70 = vector.extract_strided_slice %17 {offsets = [0, 5], sizes = [8, 1], strides = [1, 1]} : vector<8x8xf32> to vector<8x1xf32>
    %71 = vector.broadcast %70 : vector<8x1xf32> to vector<8x128xf32>
    %72 = arith.mulf %69, %71 : vector<8x128xf32>
    %73 = arith.addf %64, %72 : vector<8x128xf32>
    %74 = vector.extract_strided_slice %0 {offsets = [0, 6], sizes = [8, 1], strides = [1, 1]} : vector<8x8xi32> to vector<8x1xi32>
    %75 = vector.broadcast %74 : vector<8x1xi32> to vector<8x128xi32>
    %76 = arith.cmpi eq, %18, %75 : vector<8x128xi32>
    %77 = arith.extui %76 : vector<8x128xi1> to vector<8x128xi32>
    %78 = arith.sitofp %77 : vector<8x128xi32> to vector<8x128xf32>
    %79 = vector.extract_strided_slice %17 {offsets = [0, 6], sizes = [8, 1], strides = [1, 1]} : vector<8x8xf32> to vector<8x1xf32>
    %80 = vector.broadcast %79 : vector<8x1xf32> to vector<8x128xf32>
    %81 = arith.mulf %78, %80 : vector<8x128xf32>
    %82 = arith.addf %73, %81 : vector<8x128xf32>
    %83 = vector.extract_strided_slice %0 {offsets = [0, 7], sizes = [8, 1], strides = [1, 1]} : vector<8x8xi32> to vector<8x1xi32>
    %84 = vector.broadcast %83 : vector<8x1xi32> to vector<8x128xi32>
    %85 = arith.cmpi eq, %18, %84 : vector<8x128xi32>
    %86 = arith.extui %85 : vector<8x128xi1> to vector<8x128xi32>
    %87 = arith.sitofp %86 : vector<8x128xi32> to vector<8x128xf32>
    %88 = vector.extract_strided_slice %17 {offsets = [0, 7], sizes = [8, 1], strides = [1, 1]} : vector<8x8xf32> to vector<8x1xf32>
    %89 = vector.broadcast %88 : vector<8x1xf32> to vector<8x128xf32>
    %90 = arith.mulf %87, %89 : vector<8x128xf32>
    %91 = arith.addf %82, %90 : vector<8x128xf32>
    %92 = vector.broadcast %12 : vector<8x1xf32> to vector<8x128xf32>
    %93 = arith.mulf %91, %92 : vector<8x128xf32>
    %94 = arith.truncf %93 : vector<8x128xf32> to vector<8x128xbf16>
    %95 = arith.truncf %7 : vector<128x32xf32> to vector<128x32xbf16>
    %96 = arith.truncf %8 : vector<128x32xf32> to vector<128x32xbf16>
    %cst_20 = arith.constant dense<0.000000e+00> : vector<8x32xf32>
    %97 = tpu.matmul %94, %95, %cst_20 {dimension_numbers = #tpu.dot_dimension_numbers<[1], [0], [0], [1], [0, 0, 1, 1], [], []>} : vector<8x128xbf16>, vector<128x32xbf16>, vector<8x32xf32> -> vector<8x32xf32>
    %cst_21 = arith.constant dense<0.000000e+00> : vector<8x32xf32>
    %98 = tpu.matmul %94, %96, %cst_21 {dimension_numbers = #tpu.dot_dimension_numbers<[1], [0], [0], [1], [0, 0, 1, 1], [], []>} : vector<8x128xbf16>, vector<128x32xbf16>, vector<8x32xf32> -> vector<8x32xf32>
    %99 = arith.truncf %97 : vector<8x32xf32> to vector<8x32xbf16>
    %cst_22 = arith.constant dense<0.000000e+00> : vector<8x128xf32>
    %100 = tpu.matmul %99, %95, %cst_22 {dimension_numbers = #tpu.dot_dimension_numbers<[1], [1], [0], [0], [0, 0, 1, 0], [], []>} : vector<8x32xbf16>, vector<128x32xbf16>, vector<8x128xf32> -> vector<8x128xf32>
    %101 = arith.truncf %98 : vector<8x32xf32> to vector<8x32xbf16>
    %cst_23 = arith.constant dense<0.000000e+00> : vector<8x128xf32>
    %102 = tpu.matmul %101, %96, %cst_23 {dimension_numbers = #tpu.dot_dimension_numbers<[1], [1], [0], [0], [0, 0, 1, 0], [], []>} : vector<8x32xbf16>, vector<128x32xbf16>, vector<8x128xf32> -> vector<8x128xf32>
    %103 = vector.broadcast %2 : vector<8x1xi32> to vector<8x128xi32>
    %104 = arith.cmpi eq, %18, %103 : vector<8x128xi32>
    %105 = arith.addf %102, %3 : vector<8x128xf32>
    %cst_24 = arith.constant -1.000000e+30 : f32
    %106 = vector.broadcast %cst_24 : f32 to vector<8x128xf32>
    %107 = arith.select %104, %106, %105 : vector<8x128xi1>, vector<8x128xf32>
    %cst_25 = arith.constant 0.000000e+00 : f32
    %108 = vector.broadcast %cst_25 : f32 to vector<8x128xf32>
    %109 = arith.select %104, %102, %108 : vector<8x128xi1>, vector<8x128xf32>
    %cst_26 = arith.constant dense<0.000000e+00> : vector<8xf32>
    %110 = vector.multi_reduction <add>, %109, %cst_26 [1] : vector<8x128xf32> to vector<8xf32>
    %111 = vector.shape_cast %110 : vector<8xf32> to vector<8x1xf32>
    %c0_27 = arith.constant 0 : index
    %c0_28 = arith.constant 0 : index
    %112 = vector.load %arg13[%c0_27, %c0_28] : memref<8x6xf32, #tpu.memory_space<vmem>>, vector<8x1xf32>
    tpu.vector_store %arg13[%c0_27, %c0_28], %111 {strides = array<i32>} : memref<8x6xf32, #tpu.memory_space<vmem>>, vector<8x1xf32>,
    %cst_29 = arith.constant 0.000000e+00 : f32
    %113 = vector.broadcast %cst_29 : f32 to vector<8x128xf32>
    %114 = arith.select %104, %100, %113 : vector<8x128xi1>, vector<8x128xf32>
    %cst_30 = arith.constant dense<0.000000e+00> : vector<8xf32>
    %115 = vector.multi_reduction <add>, %114, %cst_30 [1] : vector<8x128xf32> to vector<8xf32>
    %116 = vector.shape_cast %115 : vector<8xf32> to vector<8x1xf32>
    %c0_31 = arith.constant 0 : index
    %c0_32 = arith.constant 0 : index
    %117 = vector.load %arg14[%c0_31, %c0_32] : memref<8x6xf32, #tpu.memory_space<vmem>>, vector<8x1xf32>
    tpu.vector_store %arg14[%c0_31, %c0_32], %116 {strides = array<i32>} : memref<8x6xf32, #tpu.memory_space<vmem>>, vector<8x1xf32>,
    %cst_33 = arith.constant dense<0xFF800000> : vector<8xf32>
    %118 = vector.multi_reduction <maximumf>, %107, %cst_33 [1] : vector<8x128xf32> to vector<8xf32>
    %119 = vector.shape_cast %118 : vector<8xf32> to vector<8x1xf32>
    %120 = vector.broadcast %119 : vector<8x1xf32> to vector<8x128xf32>
    %121 = arith.cmpf oeq, %107, %120 : vector<8x128xf32>
    %c128_i32 = arith.constant 128 : i32
    %122 = vector.broadcast %c128_i32 : i32 to vector<8x128xi32>
    %123 = arith.select %121, %18, %122 : vector<8x128xi1>, vector<8x128xi32>
    %cst_34 = arith.constant dense<2147483647> : vector<8xi32>
    %124 = vector.multi_reduction <minsi>, %123, %cst_34 [1] : vector<8x128xi32> to vector<8xi32>
    %125 = vector.shape_cast %124 : vector<8xi32> to vector<8x1xi32>
    %126 = vector.broadcast %125 : vector<8x1xi32> to vector<8x128xi32>
    %127 = arith.cmpi eq, %18, %126 : vector<8x128xi32>
    %cst_35 = arith.constant 0.000000e+00 : f32
    %128 = vector.broadcast %cst_35 : f32 to vector<8x128xf32>
    %129 = arith.select %127, %102, %128 : vector<8x128xi1>, vector<8x128xf32>
    %cst_36 = arith.constant dense<0.000000e+00> : vector<8xf32>
    %130 = vector.multi_reduction <add>, %129, %cst_36 [1] : vector<8x128xf32> to vector<8xf32>
    %131 = vector.shape_cast %130 : vector<8xf32> to vector<8x1xf32>
    %c0_37 = arith.constant 0 : index
    %c1 = arith.constant 1 : index
    %132 = vector.load %arg13[%c0_37, %c1] : memref<8x6xf32, #tpu.memory_space<vmem>>, vector<8x1xf32>
    tpu.vector_store %arg13[%c0_37, %c1], %131 {strides = array<i32>} : memref<8x6xf32, #tpu.memory_space<vmem>>, vector<8x1xf32>,
    %cst_38 = arith.constant 0.000000e+00 : f32
    %133 = vector.broadcast %cst_38 : f32 to vector<8x128xf32>
    %134 = arith.select %127, %100, %133 : vector<8x128xi1>, vector<8x128xf32>
    %cst_39 = arith.constant dense<0.000000e+00> : vector<8xf32>
    %135 = vector.multi_reduction <add>, %134, %cst_39 [1] : vector<8x128xf32> to vector<8xf32>
    %136 = vector.shape_cast %135 : vector<8xf32> to vector<8x1xf32>
    %c0_40 = arith.constant 0 : index
    %c1_41 = arith.constant 1 : index
    %137 = vector.load %arg14[%c0_40, %c1_41] : memref<8x6xf32, #tpu.memory_space<vmem>>, vector<8x1xf32>
    tpu.vector_store %arg14[%c0_40, %c1_41], %136 {strides = array<i32>} : memref<8x6xf32, #tpu.memory_space<vmem>>, vector<8x1xf32>,
    %cst_42 = arith.constant -1.000000e+30 : f32
    %138 = vector.broadcast %cst_42 : f32 to vector<8x128xf32>
    %139 = arith.select %127, %138, %107 : vector<8x128xi1>, vector<8x128xf32>
    %cst_43 = arith.constant dense<0xFF800000> : vector<8xf32>
    %140 = vector.multi_reduction <maximumf>, %139, %cst_43 [1] : vector<8x128xf32> to vector<8xf32>
    %141 = vector.shape_cast %140 : vector<8xf32> to vector<8x1xf32>
    %142 = vector.broadcast %141 : vector<8x1xf32> to vector<8x128xf32>
    %143 = arith.cmpf oeq, %139, %142 : vector<8x128xf32>
    %c128_i32_44 = arith.constant 128 : i32
    %144 = vector.broadcast %c128_i32_44 : i32 to vector<8x128xi32>
    %145 = arith.select %143, %18, %144 : vector<8x128xi1>, vector<8x128xi32>
    %cst_45 = arith.constant dense<2147483647> : vector<8xi32>
    %146 = vector.multi_reduction <minsi>, %145, %cst_45 [1] : vector<8x128xi32> to vector<8xi32>
    %147 = vector.shape_cast %146 : vector<8xi32> to vector<8x1xi32>
    %148 = vector.broadcast %147 : vector<8x1xi32> to vector<8x128xi32>
    %149 = arith.cmpi eq, %18, %148 : vector<8x128xi32>
    %cst_46 = arith.constant 0.000000e+00 : f32
    %150 = vector.broadcast %cst_46 : f32 to vector<8x128xf32>
    %151 = arith.select %149, %102, %150 : vector<8x128xi1>, vector<8x128xf32>
    %cst_47 = arith.constant dense<0.000000e+00> : vector<8xf32>
    %152 = vector.multi_reduction <add>, %151, %cst_47 [1] : vector<8x128xf32> to vector<8xf32>
    %153 = vector.shape_cast %152 : vector<8xf32> to vector<8x1xf32>
    %c0_48 = arith.constant 0 : index
    %c2 = arith.constant 2 : index
    %154 = vector.load %arg13[%c0_48, %c2] : memref<8x6xf32, #tpu.memory_space<vmem>>, vector<8x1xf32>
    tpu.vector_store %arg13[%c0_48, %c2], %153 {strides = array<i32>} : memref<8x6xf32, #tpu.memory_space<vmem>>, vector<8x1xf32>,
    %cst_49 = arith.constant 0.000000e+00 : f32
    %155 = vector.broadcast %cst_49 : f32 to vector<8x128xf32>
    %156 = arith.select %149, %100, %155 : vector<8x128xi1>, vector<8x128xf32>
    %cst_50 = arith.constant dense<0.000000e+00> : vector<8xf32>
    %157 = vector.multi_reduction <add>, %156, %cst_50 [1] : vector<8x128xf32> to vector<8xf32>
    %158 = vector.shape_cast %157 : vector<8xf32> to vector<8x1xf32>
    %c0_51 = arith.constant 0 : index
    %c2_52 = arith.constant 2 : index
    %159 = vector.load %arg14[%c0_51, %c2_52] : memref<8x6xf32, #tpu.memory_space<vmem>>, vector<8x1xf32>
    tpu.vector_store %arg14[%c0_51, %c2_52], %158 {strides = array<i32>} : memref<8x6xf32, #tpu.memory_space<vmem>>, vector<8x1xf32>,
    %cst_53 = arith.constant -1.000000e+30 : f32
    %160 = vector.broadcast %cst_53 : f32 to vector<8x128xf32>
    %161 = arith.select %149, %160, %139 : vector<8x128xi1>, vector<8x128xf32>
    %cst_54 = arith.constant dense<0xFF800000> : vector<8xf32>
    %162 = vector.multi_reduction <maximumf>, %161, %cst_54 [1] : vector<8x128xf32> to vector<8xf32>
    %163 = vector.shape_cast %162 : vector<8xf32> to vector<8x1xf32>
    %164 = vector.broadcast %163 : vector<8x1xf32> to vector<8x128xf32>
    %165 = arith.cmpf oeq, %161, %164 : vector<8x128xf32>
    %c128_i32_55 = arith.constant 128 : i32
    %166 = vector.broadcast %c128_i32_55 : i32 to vector<8x128xi32>
    %167 = arith.select %165, %18, %166 : vector<8x128xi1>, vector<8x128xi32>
    %cst_56 = arith.constant dense<2147483647> : vector<8xi32>
    %168 = vector.multi_reduction <minsi>, %167, %cst_56 [1] : vector<8x128xi32> to vector<8xi32>
    %169 = vector.shape_cast %168 : vector<8xi32> to vector<8x1xi32>
    %170 = vector.broadcast %169 : vector<8x1xi32> to vector<8x128xi32>
    %171 = arith.cmpi eq, %18, %170 : vector<8x128xi32>
    %cst_57 = arith.constant 0.000000e+00 : f32
    %172 = vector.broadcast %cst_57 : f32 to vector<8x128xf32>
    %173 = arith.select %171, %102, %172 : vector<8x128xi1>, vector<8x128xf32>
    %cst_58 = arith.constant dense<0.000000e+00> : vector<8xf32>
    %174 = vector.multi_reduction <add>, %173, %cst_58 [1] : vector<8x128xf32> to vector<8xf32>
    %175 = vector.shape_cast %174 : vector<8xf32> to vector<8x1xf32>
    %c0_59 = arith.constant 0 : index
    %c3 = arith.constant 3 : index
    %176 = vector.load %arg13[%c0_59, %c3] : memref<8x6xf32, #tpu.memory_space<vmem>>, vector<8x1xf32>
    tpu.vector_store %arg13[%c0_59, %c3], %175 {strides = array<i32>} : memref<8x6xf32, #tpu.memory_space<vmem>>, vector<8x1xf32>,
    %cst_60 = arith.constant 0.000000e+00 : f32
    %177 = vector.broadcast %cst_60 : f32 to vector<8x128xf32>
    %178 = arith.select %171, %100, %177 : vector<8x128xi1>, vector<8x128xf32>
    %cst_61 = arith.constant dense<0.000000e+00> : vector<8xf32>
    %179 = vector.multi_reduction <add>, %178, %cst_61 [1] : vector<8x128xf32> to vector<8xf32>
    %180 = vector.shape_cast %179 : vector<8xf32> to vector<8x1xf32>
    %c0_62 = arith.constant 0 : index
    %c3_63 = arith.constant 3 : index
    %181 = vector.load %arg14[%c0_62, %c3_63] : memref<8x6xf32, #tpu.memory_space<vmem>>, vector<8x1xf32>
    tpu.vector_store %arg14[%c0_62, %c3_63], %180 {strides = array<i32>} : memref<8x6xf32, #tpu.memory_space<vmem>>, vector<8x1xf32>,
    %cst_64 = arith.constant -1.000000e+30 : f32
    %182 = vector.broadcast %cst_64 : f32 to vector<8x128xf32>
    %183 = arith.select %171, %182, %161 : vector<8x128xi1>, vector<8x128xf32>
    %cst_65 = arith.constant dense<0xFF800000> : vector<8xf32>
    %184 = vector.multi_reduction <maximumf>, %183, %cst_65 [1] : vector<8x128xf32> to vector<8xf32>
    %185 = vector.shape_cast %184 : vector<8xf32> to vector<8x1xf32>
    %186 = vector.broadcast %185 : vector<8x1xf32> to vector<8x128xf32>
    %187 = arith.cmpf oeq, %183, %186 : vector<8x128xf32>
    %c128_i32_66 = arith.constant 128 : i32
    %188 = vector.broadcast %c128_i32_66 : i32 to vector<8x128xi32>
    %189 = arith.select %187, %18, %188 : vector<8x128xi1>, vector<8x128xi32>
    %cst_67 = arith.constant dense<2147483647> : vector<8xi32>
    %190 = vector.multi_reduction <minsi>, %189, %cst_67 [1] : vector<8x128xi32> to vector<8xi32>
    %191 = vector.shape_cast %190 : vector<8xi32> to vector<8x1xi32>
    %192 = vector.broadcast %191 : vector<8x1xi32> to vector<8x128xi32>
    %193 = arith.cmpi eq, %18, %192 : vector<8x128xi32>
    %cst_68 = arith.constant 0.000000e+00 : f32
    %194 = vector.broadcast %cst_68 : f32 to vector<8x128xf32>
    %195 = arith.select %193, %102, %194 : vector<8x128xi1>, vector<8x128xf32>
    %cst_69 = arith.constant dense<0.000000e+00> : vector<8xf32>
    %196 = vector.multi_reduction <add>, %195, %cst_69 [1] : vector<8x128xf32> to vector<8xf32>
    %197 = vector.shape_cast %196 : vector<8xf32> to vector<8x1xf32>
    %c0_70 = arith.constant 0 : index
    %c4 = arith.constant 4 : index
    %198 = vector.load %arg13[%c0_70, %c4] : memref<8x6xf32, #tpu.memory_space<vmem>>, vector<8x1xf32>
    tpu.vector_store %arg13[%c0_70, %c4], %197 {strides = array<i32>} : memref<8x6xf32, #tpu.memory_space<vmem>>, vector<8x1xf32>,
    %cst_71 = arith.constant 0.000000e+00 : f32
    %199 = vector.broadcast %cst_71 : f32 to vector<8x128xf32>
    %200 = arith.select %193, %100, %199 : vector<8x128xi1>, vector<8x128xf32>
    %cst_72 = arith.constant dense<0.000000e+00> : vector<8xf32>
    %201 = vector.multi_reduction <add>, %200, %cst_72 [1] : vector<8x128xf32> to vector<8xf32>
    %202 = vector.shape_cast %201 : vector<8xf32> to vector<8x1xf32>
    %c0_73 = arith.constant 0 : index
    %c4_74 = arith.constant 4 : index
    %203 = vector.load %arg14[%c0_73, %c4_74] : memref<8x6xf32, #tpu.memory_space<vmem>>, vector<8x1xf32>
    tpu.vector_store %arg14[%c0_73, %c4_74], %202 {strides = array<i32>} : memref<8x6xf32, #tpu.memory_space<vmem>>, vector<8x1xf32>,
    %cst_75 = arith.constant -1.000000e+30 : f32
    %204 = vector.broadcast %cst_75 : f32 to vector<8x128xf32>
    %205 = arith.select %193, %204, %183 : vector<8x128xi1>, vector<8x128xf32>
    %cst_76 = arith.constant dense<0xFF800000> : vector<8xf32>
    %206 = vector.multi_reduction <maximumf>, %205, %cst_76 [1] : vector<8x128xf32> to vector<8xf32>
    %207 = vector.shape_cast %206 : vector<8xf32> to vector<8x1xf32>
    %208 = vector.broadcast %207 : vector<8x1xf32> to vector<8x128xf32>
    %209 = arith.cmpf oeq, %205, %208 : vector<8x128xf32>
    %c128_i32_77 = arith.constant 128 : i32
    %210 = vector.broadcast %c128_i32_77 : i32 to vector<8x128xi32>
    %211 = arith.select %209, %18, %210 : vector<8x128xi1>, vector<8x128xi32>
    %cst_78 = arith.constant dense<2147483647> : vector<8xi32>
    %212 = vector.multi_reduction <minsi>, %211, %cst_78 [1] : vector<8x128xi32> to vector<8xi32>
    %213 = vector.shape_cast %212 : vector<8xi32> to vector<8x1xi32>
    %214 = vector.broadcast %213 : vector<8x1xi32> to vector<8x128xi32>
    %215 = arith.cmpi eq, %18, %214 : vector<8x128xi32>
    %cst_79 = arith.constant 0.000000e+00 : f32
    %216 = vector.broadcast %cst_79 : f32 to vector<8x128xf32>
    %217 = arith.select %215, %102, %216 : vector<8x128xi1>, vector<8x128xf32>
    %cst_80 = arith.constant dense<0.000000e+00> : vector<8xf32>
    %218 = vector.multi_reduction <add>, %217, %cst_80 [1] : vector<8x128xf32> to vector<8xf32>
    %219 = vector.shape_cast %218 : vector<8xf32> to vector<8x1xf32>
    %c0_81 = arith.constant 0 : index
    %c5 = arith.constant 5 : index
    %220 = vector.load %arg13[%c0_81, %c5] : memref<8x6xf32, #tpu.memory_space<vmem>>, vector<8x1xf32>
    tpu.vector_store %arg13[%c0_81, %c5], %219 {strides = array<i32>} : memref<8x6xf32, #tpu.memory_space<vmem>>, vector<8x1xf32>,
    %cst_82 = arith.constant 0.000000e+00 : f32
    %221 = vector.broadcast %cst_82 : f32 to vector<8x128xf32>
    %222 = arith.select %215, %100, %221 : vector<8x128xi1>, vector<8x128xf32>
    %cst_83 = arith.constant dense<0.000000e+00> : vector<8xf32>
    %223 = vector.multi_reduction <add>, %222, %cst_83 [1] : vector<8x128xf32> to vector<8xf32>
    %224 = vector.shape_cast %223 : vector<8xf32> to vector<8x1xf32>
    %c0_84 = arith.constant 0 : index
    %c5_85 = arith.constant 5 : index
    %225 = vector.load %arg14[%c0_84, %c5_85] : memref<8x6xf32, #tpu.memory_space<vmem>>, vector<8x1xf32>
    tpu.vector_store %arg14[%c0_84, %c5_85], %224 {strides = array<i32>} : memref<8x6xf32, #tpu.memory_space<vmem>>, vector<8x1xf32>,
    %c0_86 = arith.constant 0 : index
    %c0_87 = arith.constant 0 : index
    %226 = vector.load %arg13[%c0_86, %c0_87] : memref<8x6xf32, #tpu.memory_space<vmem>>, vector<8x6xf32>
    %c0_88 = arith.constant 0 : index
    %c0_89 = arith.constant 0 : index
    %227 = vector.load %arg14[%c0_88, %c0_89] : memref<8x6xf32, #tpu.memory_space<vmem>>, vector<8x6xf32>
    %cst_90 = arith.constant dense<0xFF800000> : vector<8xf32>
    %228 = vector.multi_reduction <maximumf>, %226, %cst_90 [1] : vector<8x6xf32> to vector<8xf32>
    %229 = vector.shape_cast %228 : vector<8xf32> to vector<8x1xf32>
    %230 = vector.broadcast %229 : vector<8x1xf32> to vector<8x6xf32>
    %231 = arith.subf %226, %230 : vector<8x6xf32>
    %232 = math.exp %231 : vector<8x6xf32>
    %cst_91 = arith.constant dense<0.000000e+00> : vector<8xf32>
    %233 = vector.multi_reduction <add>, %232, %cst_91 [1] : vector<8x6xf32> to vector<8xf32>
    %234 = vector.shape_cast %233 : vector<8xf32> to vector<8x1xf32>
    %235 = vector.broadcast %234 : vector<8x1xf32> to vector<8x6xf32>
    %236 = arith.divf %232, %235 : vector<8x6xf32>
    %cst_92 = arith.constant dense<0xFF800000> : vector<8xf32>
    %237 = vector.multi_reduction <maximumf>, %227, %cst_92 [1] : vector<8x6xf32> to vector<8xf32>
    %238 = vector.shape_cast %237 : vector<8xf32> to vector<8x1xf32>
    %239 = vector.broadcast %238 : vector<8x1xf32> to vector<8x6xf32>
    %240 = arith.subf %227, %239 : vector<8x6xf32>
    %241 = math.exp %240 : vector<8x6xf32>
    %cst_93 = arith.constant dense<0.000000e+00> : vector<8xf32>
    %242 = vector.multi_reduction <add>, %241, %cst_93 [1] : vector<8x6xf32> to vector<8xf32>
    %243 = vector.shape_cast %242 : vector<8xf32> to vector<8x1xf32>
    %244 = vector.broadcast %243 : vector<8x1xf32> to vector<8x6xf32>
    %245 = arith.divf %241, %244 : vector<8x6xf32>
    %cst_94 = arith.constant 5.000000e+00 : f32
    %246 = vector.broadcast %cst_94 : f32 to vector<8x6xf32>
    %247 = arith.mulf %246, %236 : vector<8x6xf32>
    %248 = arith.addf %247, %245 : vector<8x6xf32>
    %cst_95 = arith.constant 9.99999997E-7 : f32
    %249 = vector.broadcast %cst_95 : f32 to vector<8x6xf32>
    %250 = arith.addf %248, %249 : vector<8x6xf32>
    %251 = arith.divf %245, %250 : vector<8x6xf32>
    %252 = arith.divf %236, %250 : vector<8x6xf32>
    %253 = tpu.iota {dimensions = array<i32: 1>} : vector<8x6xi32>
    %c0_i32 = arith.constant 0 : i32
    %254 = vector.broadcast %c0_i32 : i32 to vector<8x6xi32>
    %255 = arith.cmpi eq, %253, %254 : vector<8x6xi32>
    %256 = arith.select %255, %251, %252 : vector<8x6xi1>, vector<8x6xf32>
    %257 = math.log %256 : vector<8x6xf32>
    %258 = vector.shape_cast %257 : vector<8x6xf32> to vector<1x8x6xf32>
    %cst_96 = arith.constant dense<0.000000e+00> : vector<1xf32>
    %259 = vector.multi_reduction <add>, %258, %cst_96 [1, 2] : vector<1x8x6xf32> to vector<1xf32>
    %260 = vector.shape_cast %259 : vector<1xf32> to vector<1x1x1xf32>
    %261 = vector.extract %260[0, 0, 0] : f32 from vector<1x1x1xf32>
    %262 = vector.broadcast %9 : vector<1x32xf32> to vector<8x32xf32>
    %263 = arith.mulf %97, %262 : vector<8x32xf32>
    %cst_97 = arith.constant dense<0.000000e+00> : vector<8xf32>
    %264 = vector.multi_reduction <add>, %263, %cst_97 [1] : vector<8x32xf32> to vector<8xf32>
    %265 = vector.shape_cast %264 : vector<8xf32> to vector<8x1xf32>
    %266 = arith.mulf %5, %17 : vector<8x8xf32>
    %cst_98 = arith.constant dense<0.000000e+00> : vector<8xf32>
    %267 = vector.multi_reduction <add>, %266, %cst_98 [1] : vector<8x8xf32> to vector<8xf32>
    %268 = vector.shape_cast %267 : vector<8xf32> to vector<8x1xf32>
    %269 = arith.mulf %268, %12 : vector<8x1xf32>
    %270 = arith.addf %265, %269 : vector<8x1xf32>
    %c1_i32 = arith.constant 1 : i32
    %271 = vector.broadcast %c1_i32 : i32 to vector<8x1xi32>
    %272 = arith.subi %1, %271 : vector<8x1xi32>
    %273 = vector.broadcast %272 : vector<8x1xi32> to vector<8x8xi32>
    %274 = arith.cmpi eq, %13, %273 : vector<8x8xi32>
    %275 = arith.extui %274 : vector<8x8xi1> to vector<8x8xi32>
    %276 = arith.sitofp %275 : vector<8x8xi32> to vector<8x8xf32>
    %277 = arith.mulf %4, %276 : vector<8x8xf32>
    %cst_99 = arith.constant dense<0.000000e+00> : vector<8xf32>
    %278 = vector.multi_reduction <add>, %277, %cst_99 [1] : vector<8x8xf32> to vector<8xf32>
    %279 = vector.shape_cast %278 : vector<8xf32> to vector<8x1xf32>
    %280 = arith.subf %6, %279 : vector<8x1xf32>
    %281 = arith.subf %270, %280 : vector<8x1xf32>
    %cst_100 = arith.constant 4.320000e+03 : f32
    %282 = vector.broadcast %cst_100 : f32 to vector<8x1xf32>
    %283 = arith.divf %281, %282 : vector<8x1xf32>
    %284 = arith.mulf %283, %283 : vector<8x1xf32>
    %285 = vector.shape_cast %284 : vector<8x1xf32> to vector<1x8x1xf32>
    %cst_101 = arith.constant dense<0.000000e+00> : vector<1xf32>
    %286 = vector.multi_reduction <add>, %285, %cst_101 [1, 2] : vector<1x8x1xf32> to vector<1xf32>
    %287 = vector.shape_cast %286 : vector<1xf32> to vector<1x1x1xf32>
    %288 = vector.extract %287[0, 0, 0] : f32 from vector<1x1x1xf32>
    %cst_102 = arith.constant 1.000000e+00 : f32
    %289 = vector.broadcast %cst_102 : f32 to vector<1x1x1xf32>
    %290 = vector.broadcast %261 : f32 to vector<1x1x1xf32>
    %291 = arith.mulf %290, %289 : vector<1x1x1xf32>
    %c0_103 = arith.constant 0 : index
    %c0_104 = arith.constant 0 : index
    %c0_105 = arith.constant 0 : index
    %292 = vector.load %arg11[%c0_103, %c0_104, %c0_105] : memref<1x1x1xf32, #tpu.memory_space<vmem>>, vector<1x1x1xf32>
    tpu.vector_store %arg11[%c0_103, %c0_104, %c0_105], %291 {strides = array<i32>} : memref<1x1x1xf32, #tpu.memory_space<vmem>>, vector<1x1x1xf32>,
    %cst_106 = arith.constant 1.000000e+00 : f32
    %293 = vector.broadcast %cst_106 : f32 to vector<1x1x1xf32>
    %294 = vector.broadcast %288 : f32 to vector<1x1x1xf32>
    %295 = arith.mulf %294, %293 : vector<1x1x1xf32>
    %c0_107 = arith.constant 0 : index
    %c0_108 = arith.constant 0 : index
    %c0_109 = arith.constant 0 : index
    %296 = vector.load %arg12[%c0_107, %c0_108, %c0_109] : memref<1x1x1xf32, #tpu.memory_space<vmem>>, vector<1x1x1xf32>
    tpu.vector_store %arg12[%c0_107, %c0_108, %c0_109], %295 {strides = array<i32>} : memref<1x1x1xf32, #tpu.memory_space<vmem>>, vector<1x1x1xf32>,
    return
  }
  func.func @transform_0(%arg0: i32) -> (i32, i32) {
    %c0_i32 = arith.constant 0 : i32
    %c0_i32_0 = arith.constant 0 : i32
    return %arg0, %c0_i32 : i32, i32
  }
  func.func @transform_1(%arg0: i32) -> (i32, i32) {
    %c0_i32 = arith.constant 0 : i32
    %c0_i32_0 = arith.constant 0 : i32
    return %arg0, %c0_i32 : i32, i32
  }
  func.func @transform_2(%arg0: i32) -> (i32, i32) {
    %c0_i32 = arith.constant 0 : i32
    %c0_i32_0 = arith.constant 0 : i32
    return %arg0, %c0_i32 : i32, i32
  }
  func.func @transform_3(%arg0: i32) -> (i32, i32) {
    %c0_i32 = arith.constant 0 : i32
    %c0_i32_0 = arith.constant 0 : i32
    return %arg0, %c0_i32 : i32, i32
  }
  func.func @transform_4(%arg0: i32) -> (i32, i32) {
    %c0_i32 = arith.constant 0 : i32
    %c0_i32_0 = arith.constant 0 : i32
    return %arg0, %c0_i32 : i32, i32
  }
  func.func @transform_5(%arg0: i32) -> (i32, i32) {
    %c0_i32 = arith.constant 0 : i32
    %c0_i32_0 = arith.constant 0 : i32
    return %arg0, %c0_i32 : i32, i32
  }
  func.func @transform_6(%arg0: i32) -> (i32, i32) {
    %c0_i32 = arith.constant 0 : i32
    %c0_i32_0 = arith.constant 0 : i32
    return %arg0, %c0_i32 : i32, i32
  }
  func.func @transform_7(%arg0: i32) -> (i32, i32) {
    %c0_i32 = arith.constant 0 : i32
    %c0_i32_0 = arith.constant 0 : i32
    %c0_i32_1 = arith.constant 0 : i32
    return %c0_i32, %c0_i32_0 : i32, i32
  }
  func.func @transform_8(%arg0: i32) -> (i32, i32) {
    %c0_i32 = arith.constant 0 : i32
    %c0_i32_0 = arith.constant 0 : i32
    %c0_i32_1 = arith.constant 0 : i32
    return %c0_i32, %c0_i32_0 : i32, i32
  }
  func.func @transform_9(%arg0: i32) -> (i32, i32) {
    %c0_i32 = arith.constant 0 : i32
    %c0_i32_0 = arith.constant 0 : i32
    %c0_i32_1 = arith.constant 0 : i32
    return %c0_i32, %c0_i32_0 : i32, i32
  }
  func.func @transform_10(%arg0: i32) -> (i32, i32, i32) {
    %c0_i32 = arith.constant 0 : i32
    %c0_i32_0 = arith.constant 0 : i32
    %c0_i32_1 = arith.constant 0 : i32
    return %arg0, %c0_i32, %c0_i32_0 : i32, i32, i32
  }
  func.func @transform_11(%arg0: i32) -> (i32, i32, i32) {
    %c0_i32 = arith.constant 0 : i32
    %c0_i32_0 = arith.constant 0 : i32
    %c0_i32_1 = arith.constant 0 : i32
    return %arg0, %c0_i32, %c0_i32_0 : i32, i32, i32
  }
}

</mosaic_0001>

<llo_original>
// kernel: tpu_custom_call.1
$region0: #{tpu_custom_call.1}
  #allocation0 [shape = 'u32[]', space=smem, size = 0x4, offset = 0x4, fixed_abs, tag = 'smem constant byte address 0x4 - core index']
  #allocation1 [shape = 'u32[144,128]{1,0:T(1,128)}', space=vmem, size = 0x12000, scoped, tag = 'internal scratch']
  #allocation2 [shape = 'f32[8,6]{1,0:T(8,128)}', space=vmem, size = 0x1000, scoped, tag = 'scratch operand']
  #allocation3 [shape = 'f32[8,6]{1,0:T(8,128)}', space=vmem, size = 0x1000, scoped, tag = 'scratch operand']
  %s0 = inlined_call_operand.vmem [shape: s32[16,8], index: 0, kind: input, shape index: {}]
  %s1 = inlined_call_operand.vmem [shape: s32[16,1], index: 1, kind: input, shape index: {}]
  %s2 = inlined_call_operand.vmem [shape: s32[16,1], index: 2, kind: input, shape index: {}]
  %s3 = inlined_call_operand.vmem [shape: f32[16,128], index: 3, kind: input, shape index: {}]
  %s4 = inlined_call_operand.vmem [shape: f32[16,8], index: 4, kind: input, shape index: {}]
  %s5 = inlined_call_operand.vmem [shape: f32[16,8], index: 5, kind: input, shape index: {}]
  %s6 = inlined_call_operand.vmem [shape: f32[16,1], index: 6, kind: input, shape index: {}]
  %s7 = inlined_call_operand.vmem [shape: f32[128,32], index: 7, kind: input, shape index: {}]
  %s8 = inlined_call_operand.vmem [shape: f32[128,32], index: 8, kind: input, shape index: {}]
  %s9 = inlined_call_operand.vmem [shape: f32[1,32], index: 9, kind: input, shape index: {}]
  %s10 = inlined_call_operand.vmem [shape: f32[2,1,1], index: 10, kind: output, shape index: {0}]
  %s11 = inlined_call_operand.vmem [shape: f32[2,1,1], index: 11, kind: output, shape index: {1}]
  %12 = xla_tuple %s10, %s11
  %s13 = sld [smem:[#allocation0]]
  $region81: #{tpu_custom_call.1} parent=0
    _
  %s15 = ssub.s32 1, %s13
  %s16 = scalar_select 0, %s15, %s13
  loop: start=0, step=1, limit=4
  $region2: #{tpu_custom_call.1} parent=0 // loop_pre_header
    _
  $region3: #{tpu_custom_call.1} parent=0 // loop_header
    %s18 = sphi 0, %s22
    %p19 = scmp.ge.s32.totalorder %s18, 4
    %s28 = sphi 0, %s30
    %s31 = sphi 0, %s28
    %s32 = sphi 0, %s31
    %s48 = sphi 0, %s32
    %s54 = sphi 0, %s56
    %s57 = sphi 0, %s54
    %s58 = sphi 0, %s57
    %s74 = sphi 0, %s58
    %s80 = sphi 0, %s82
    %s83 = sphi 0, %s80
    %s84 = sphi 0, %s83
    %s100 = sphi 0, %s84
    %s106 = sphi 0, %s108
    %s109 = sphi 0, %s106
    %s110 = sphi 0, %s109
    %s126 = sphi 0, %s110
    %s132 = sphi 0, %s134
    %s135 = sphi 0, %s132
    %s136 = sphi 0, %s135
    %s152 = sphi 0, %s136
    %s158 = sphi 0, %s160
    %s161 = sphi 0, %s158
    %s162 = sphi 0, %s161
    %s178 = sphi 0, %s162
    %s184 = sphi 0, %s186
    %s187 = sphi 0, %s184
    %s188 = sphi 0, %s187
    %s204 = sphi 0, %s188
    %s208 = sphi 0, %s208
    %s210 = sphi 0, %s208
    %s211 = sphi 0, %s210
    %s225 = sphi 0, %s211
    %s229 = sphi 0, %s229
    %s231 = sphi 0, %s229
    %s232 = sphi 0, %s231
    %s246 = sphi 0, %s232
    %s250 = sphi 0, %s250
    %s252 = sphi 0, %s250
    %s253 = sphi 0, %s252
    %s267 = sphi 0, %s253
    %s273 = sphi 0, %s275
    %s276 = sphi 0, %s273
    %s277 = sphi 0, %s276
    %s293 = sphi 0, %s277
    %s299 = sphi 0, %s301
    %s302 = sphi 0, %s299
    %s303 = sphi 0, %s302
    %s319 = sphi 0, %s303
  $region4: #{tpu_custom_call.1} parent=0 // loop_header_branch
    %21 = sbr.rel (%p19) target = $region8
  $region5: #{tpu_custom_call.1} parent=0 // loop_body
    %s23 = ssub.s32 %s18, 1
    %s24 = ssub.s32 %s18, 2
    %s25 = sadd.s32 %s18, 1
    %s26 = ssub.s32 %s18, %s25
    %p27 = scmp.eq.s32.totalorder %s26, 0
    %s29 = sadd.s32 %s28, 1
    %s30 = scalar_select %p27, %s28, %s29
    %p33 = pneg %p27
    %p34 = scmp.eq.s32.totalorder %s18, 1
    %p35 = por %p33, %p34
    %p36 = scmp.ne.s32.totalorder %s28, %s31
    %p37 = scmp.eq.s32.totalorder %s18, 0
    %p38 = por %p36, %p37
    %p39 = scmp.ne.s32.totalorder %s28, %s31
    %p40 = scmp.eq.s32.totalorder %s23, 1
    %p41 = por %p39, %p40
    %p42 = scmp.ne.s32.totalorder %s31, %s32
    %p43 = scmp.eq.s32.totalorder %s23, 0
    %p44 = por %p42, %p43
    %p45 = scmp.ne.s32.totalorder %s31, %s32
    %p46 = scmp.eq.s32.totalorder %s24, 1
    %p47 = por %p45, %p46
    %p49 = scmp.ne.s32.totalorder %s32, %s48
    %p50 = scmp.eq.s32.totalorder %s24, 0
    %p51 = por %p49, %p50
    %s52 = ssub.s32 %s18, %s25
    %p53 = scmp.eq.s32.totalorder %s52, 0
    %s55 = sadd.s32 %s54, 1
    %s56 = scalar_select %p53, %s54, %s55
    %p59 = pneg %p53
    %p60 = scmp.eq.s32.totalorder %s18, 1
    %p61 = por %p59, %p60
    %p62 = scmp.ne.s32.totalorder %s54, %s57
    %p63 = scmp.eq.s32.totalorder %s18, 0
    %p64 = por %p62, %p63
    %p65 = scmp.ne.s32.totalorder %s54, %s57
    %p66 = scmp.eq.s32.totalorder %s23, 1
    %p67 = por %p65, %p66
    %p68 = scmp.ne.s32.totalorder %s57, %s58
    %p69 = scmp.eq.s32.totalorder %s23, 0
    %p70 = por %p68, %p69
    %p71 = scmp.ne.s32.totalorder %s57, %s58
    %p72 = scmp.eq.s32.totalorder %s24, 1
    %p73 = por %p71, %p72
    %p75 = scmp.ne.s32.totalorder %s58, %s74
    %p76 = scmp.eq.s32.totalorder %s24, 0
    %p77 = por %p75, %p76
    %s78 = ssub.s32 %s18, %s25
    %p79 = scmp.eq.s32.totalorder %s78, 0
    %s81 = sadd.s32 %s80, 1
    %s82 = scalar_select %p79, %s80, %s81
    %p85 = pneg %p79
    %p86 = scmp.eq.s32.totalorder %s18, 1
    %p87 = por %p85, %p86
    %p88 = scmp.ne.s32.totalorder %s80, %s83
    %p89 = scmp.eq.s32.totalorder %s18, 0
    %p90 = por %p88, %p89
    %p91 = scmp.ne.s32.totalorder %s80, %s83
    %p92 = scmp.eq.s32.totalorder %s23, 1
    %p93 = por %p91, %p92
    %p94 = scmp.ne.s32.totalorder %s83, %s84
    %p95 = scmp.eq.s32.totalorder %s23, 0
    %p96 = por %p94, %p95
    %p97 = scmp.ne.s32.totalorder %s83, %s84
    %p98 = scmp.eq.s32.totalorder %s24, 1
    %p99 = por %p97, %p98
    %p101 = scmp.ne.s32.totalorder %s84, %s100
    %p102 = scmp.eq.s32.totalorder %s24, 0
    %p103 = por %p101, %p102
    %s104 = ssub.s32 %s18, %s25
    %p105 = scmp.eq.s32.totalorder %s104, 0
    %s107 = sadd.s32 %s106, 1
    %s108 = scalar_select %p105, %s106, %s107
    %p111 = pneg %p105
    %p112 = scmp.eq.s32.totalorder %s18, 1
    %p113 = por %p111, %p112
    %p114 = scmp.ne.s32.totalorder %s106, %s109
    %p115 = scmp.eq.s32.totalorder %s18, 0
    %p116 = por %p114, %p115
    %p117 = scmp.ne.s32.totalorder %s106, %s109
    %p118 = scmp.eq.s32.totalorder %s23, 1
    %p119 = por %p117, %p118
    %p120 = scmp.ne.s32.totalorder %s109, %s110
    %p121 = scmp.eq.s32.totalorder %s23, 0
    %p122 = por %p120, %p121
    %p123 = scmp.ne.s32.totalorder %s109, %s110
    %p124 = scmp.eq.s32.totalorder %s24, 1
    %p125 = por %p123, %p124
    %p127 = scmp.ne.s32.totalorder %s110, %s126
    %p128 = scmp.eq.s32.totalorder %s24, 0
    %p129 = por %p127, %p128
    %s130 = ssub.s32 %s18, %s25
    %p131 = scmp.eq.s32.totalorder %s130, 0
    %s133 = sadd.s32 %s132, 1
    %s134 = scalar_select %p131, %s132, %s133
    %p137 = pneg %p131
    %p138 = scmp.eq.s32.totalorder %s18, 1
    %p139 = por %p137, %p138
    %p140 = scmp.ne.s32.totalorder %s132, %s135
    %p141 = scmp.eq.s32.totalorder %s18, 0
    %p142 = por %p140, %p141
    %p143 = scmp.ne.s32.totalorder %s132, %s135
    %p144 = scmp.eq.s32.totalorder %s23, 1
    %p145 = por %p143, %p144
    %p146 = scmp.ne.s32.totalorder %s135, %s136
    %p147 = scmp.eq.s32.totalorder %s23, 0
    %p148 = por %p146, %p147
    %p149 = scmp.ne.s32.totalorder %s135, %s136
    %p150 = scmp.eq.s32.totalorder %s24, 1
    %p151 = por %p149, %p150
    %p153 = scmp.ne.s32.totalorder %s136, %s152
    %p154 = scmp.eq.s32.totalorder %s24, 0
    %p155 = por %p153, %p154
    %s156 = ssub.s32 %s18, %s25
    %p157 = scmp.eq.s32.totalorder %s156, 0
    %s159 = sadd.s32 %s158, 1
    %s160 = scalar_select %p157, %s158, %s159
    %p163 = pneg %p157
    %p164 = scmp.eq.s32.totalorder %s18, 1
    %p165 = por %p163, %p164
    %p166 = scmp.ne.s32.totalorder %s158, %s161
    %p167 = scmp.eq.s32.totalorder %s18, 0
    %p168 = por %p166, %p167
    %p169 = scmp.ne.s32.totalorder %s158, %s161
    %p170 = scmp.eq.s32.totalorder %s23, 1
    %p171 = por %p169, %p170
    %p172 = scmp.ne.s32.totalorder %s161, %s162
    %p173 = scmp.eq.s32.totalorder %s23, 0
    %p174 = por %p172, %p173
    %p175 = scmp.ne.s32.totalorder %s161, %s162
    %p176 = scmp.eq.s32.totalorder %s24, 1
    %p177 = por %p175, %p176
    %p179 = scmp.ne.s32.totalorder %s162, %s178
    %p180 = scmp.eq.s32.totalorder %s24, 0
    %p181 = por %p179, %p180
    %s182 = ssub.s32 %s18, %s25
    %p183 = scmp.eq.s32.totalorder %s182, 0
    %s185 = sadd.s32 %s184, 1
    %s186 = scalar_select %p183, %s184, %s185
    %p189 = pneg %p183
    %p190 = scmp.eq.s32.totalorder %s18, 1
    %p191 = por %p189, %p190
    %p192 = scmp.ne.s32.totalorder %s184, %s187
    %p193 = scmp.eq.s32.totalorder %s18, 0
    %p194 = por %p192, %p193
    %p195 = scmp.ne.s32.totalorder %s184, %s187
    %p196 = scmp.eq.s32.totalorder %s23, 1
    %p197 = por %p195, %p196
    %p198 = scmp.ne.s32.totalorder %s187, %s188
    %p199 = scmp.eq.s32.totalorder %s23, 0
    %p200 = por %p198, %p199
    %p201 = scmp.ne.s32.totalorder %s187, %s188
    %p202 = scmp.eq.s32.totalorder %s24, 1
    %p203 = por %p201, %p202
    %p205 = scmp.ne.s32.totalorder %s188, %s204
    %p206 = scmp.eq.s32.totalorder %s24, 0
    %p207 = por %p205, %p206
    %s209 = sadd.s32 %s208, 1
    %p212 = scmp.eq.s32.totalorder %s18, 1
    %p213 = scmp.ne.s32.totalorder %s208, %s210
    %p214 = scmp.eq.s32.totalorder %s18, 0
    %p215 = por %p213, %p214
    %p216 = scmp.ne.s32.totalorder %s208, %s210
    %p217 = scmp.eq.s32.totalorder %s23, 1
    %p218 = por %p216, %p217
    %p219 = scmp.ne.s32.totalorder %s210, %s211
    %p220 = scmp.eq.s32.totalorder %s23, 0
    %p221 = por %p219, %p220
    %p222 = scmp.ne.s32.totalorder %s210, %s211
    %p223 = scmp.eq.s32.totalorder %s24, 1
    %p224 = por %p222, %p223
    %p226 = scmp.ne.s32.totalorder %s211, %s225
    %p227 = scmp.eq.s32.totalorder %s24, 0
    %p228 = por %p226, %p227
    %s230 = sadd.s32 %s229, 1
    %p233 = scmp.eq.s32.totalorder %s18, 1
    %p234 = scmp.ne.s32.totalorder %s229, %s231
    %p235 = scmp.eq.s32.totalorder %s18, 0
    %p236 = por %p234, %p235
    %p237 = scmp.ne.s32.totalorder %s229, %s231
    %p238 = scmp.eq.s32.totalorder %s23, 1
    %p239 = por %p237, %p238
    %p240 = scmp.ne.s32.totalorder %s231, %s232
    %p241 = scmp.eq.s32.totalorder %s23, 0
    %p242 = por %p240, %p241
    %p243 = scmp.ne.s32.totalorder %s231, %s232
    %p244 = scmp.eq.s32.totalorder %s24, 1
    %p245 = por %p243, %p244
    %p247 = scmp.ne.s32.totalorder %s232, %s246
    %p248 = scmp.eq.s32.totalorder %s24, 0
    %p249 = por %p247, %p248
    %s251 = sadd.s32 %s250, 1
    %p254 = scmp.eq.s32.totalorder %s18, 1
    %p255 = scmp.ne.s32.totalorder %s250, %s252
    %p256 = scmp.eq.s32.totalorder %s18, 0
    %p257 = por %p255, %p256
    %p258 = scmp.ne.s32.totalorder %s250, %s252
    %p259 = scmp.eq.s32.totalorder %s23, 1
    %p260 = por %p258, %p259
    %p261 = scmp.ne.s32.totalorder %s252, %s253
    %p262 = scmp.eq.s32.totalorder %s23, 0
    %p263 = por %p261, %p262
    %p264 = scmp.ne.s32.totalorder %s252, %s253
    %p265 = scmp.eq.s32.totalorder %s24, 1
    %p266 = por %p264, %p265
    %p268 = scmp.ne.s32.totalorder %s253, %s267
    %p269 = scmp.eq.s32.totalorder %s24, 0
    %p270 = por %p268, %p269
    %s271 = ssub.s32 %s18, %s25
    %p272 = scmp.eq.s32.totalorder %s271, 0
    %s274 = sadd.s32 %s273, 1
    %s275 = scalar_select %p272, %s273, %s274
    %p278 = pneg %p272
    %p279 = scmp.eq.s32.totalorder %s18, 1
    %p280 = por %p278, %p279
    %p281 = scmp.ne.s32.totalorder %s273, %s276
    %p282 = scmp.eq.s32.totalorder %s18, 0
    %p283 = por %p281, %p282
    %p284 = scmp.ne.s32.totalorder %s273, %s276
    %p285 = scmp.eq.s32.totalorder %s23, 1
    %p286 = por %p284, %p285
    %p287 = scmp.ne.s32.totalorder %s276, %s277
    %p288 = scmp.eq.s32.totalorder %s23, 0
    %p289 = por %p287, %p288
    %p290 = scmp.ne.s32.totalorder %s276, %s277
    %p291 = scmp.eq.s32.totalorder %s24, 1
    %p292 = por %p290, %p291
    %p294 = scmp.ne.s32.totalorder %s277, %s293
    %p295 = scmp.eq.s32.totalorder %s24, 0
    %p296 = por %p294, %p295
    %s297 = ssub.s32 %s18, %s25
    %p298 = scmp.eq.s32.totalorder %s297, 0
    %s300 = sadd.s32 %s299, 1
    %s301 = scalar_select %p298, %s299, %s300
    %p304 = pneg %p298
    %p305 = scmp.eq.s32.totalorder %s18, 1
    %p306 = por %p304, %p305
    %p307 = scmp.ne.s32.totalorder %s299, %s302
    %p308 = scmp.eq.s32.totalorder %s18, 0
    %p309 = por %p307, %p308
    %p310 = scmp.ne.s32.totalorder %s299, %s302
    %p311 = scmp.eq.s32.totalorder %s23, 1
    %p312 = por %p310, %p311
    %p313 = scmp.ne.s32.totalorder %s302, %s303
    %p314 = scmp.eq.s32.totalorder %s23, 0
    %p315 = por %p313, %p314
    %p316 = scmp.ne.s32.totalorder %s302, %s303
    %p317 = scmp.eq.s32.totalorder %s24, 1
    %p318 = por %p316, %p317
    %p320 = scmp.ne.s32.totalorder %s303, %s319
    %p321 = scmp.eq.s32.totalorder %s24, 0
    %p322 = por %p320, %p321
    %p323 = scmp.le.s32.totalorder 1, %s18
    %p324 = scmp.lt.s32.totalorder %s18, 3
    %p325 = pnand %p323, %p324
    %p326 = pneg %p325
    // Predicated region
    $region9: #{tpu_custom_call.1} parent=5 // pred_check
      _
    $region10: #{tpu_custom_call.1} parent=5 // pred_check_branch
      %328 = sbr.rel (%p325) target = $region12
    $region11: #{tpu_custom_call.1} parent=5 // pred_region
      %s329 = ssub.s32 %s18, 1
      // Predicated region
      $region13: #{tpu_custom_call.1} parent=11 // pred_check
        %p330 = pneg %p221
      $region14: #{tpu_custom_call.1} parent=11 // pred_check_branch
        %332 = sbr.rel (%p330) target = $region16
      $region15: #{tpu_custom_call.1} parent=11 // pred_region
        _
      $region16: #{tpu_custom_call.1} parent=11 // pred_fallthru
        _
      // Predicated region
      $region17: #{tpu_custom_call.1} parent=11 // pred_check
        %p333 = pneg %p242
      $region18: #{tpu_custom_call.1} parent=11 // pred_check_branch
        %335 = sbr.rel (%p333) target = $region20
      $region19: #{tpu_custom_call.1} parent=11 // pred_region
        _
      $region20: #{tpu_custom_call.1} parent=11 // pred_fallthru
        _
      // Predicated region
      $region21: #{tpu_custom_call.1} parent=11 // pred_check
        %p336 = pneg %p263
      $region22: #{tpu_custom_call.1} parent=11 // pred_check_branch
        %338 = sbr.rel (%p336) target = $region24
      $region23: #{tpu_custom_call.1} parent=11 // pred_region
        _
      $region24: #{tpu_custom_call.1} parent=11 // pred_fallthru
        _
    $region12: #{tpu_custom_call.1} parent=5 // pred_fallthru
      _
    %p339 = scmp.lt.s32.totalorder %s18, 2
    // Predicated region
    $region25: #{tpu_custom_call.1} parent=5 // pred_check
      %p340 = pneg %p339
    $region26: #{tpu_custom_call.1} parent=5 // pred_check_branch
      %342 = sbr.rel (%p340) target = $region28
    $region27: #{tpu_custom_call.1} parent=5 // pred_region
      // Predicated region
      $region29: #{tpu_custom_call.1} parent=27 // pred_check
        %p343 = pneg %p38
      $region30: #{tpu_custom_call.1} parent=27 // pred_check_branch
        %345 = sbr.rel (%p343) target = $region32
      $region31: #{tpu_custom_call.1} parent=27 // pred_region
        %p346 = scmp.lt.s32.totalorder %s18, 1
        %s347 = scalar_select %p346, %s18, 1
        %s348 = smul.addr %s347, 8
        %s349 = scalar_lea.vmem %s0, %s348
      $region32: #{tpu_custom_call.1} parent=27 // pred_fallthru
        _
      // Predicated region
      $region33: #{tpu_custom_call.1} parent=27 // pred_check
        %p350 = pneg %p64
      $region34: #{tpu_custom_call.1} parent=27 // pred_check_branch
        %352 = sbr.rel (%p350) target = $region36
      $region35: #{tpu_custom_call.1} parent=27 // pred_region
        %p353 = scmp.lt.s32.totalorder %s18, 1
        %s354 = scalar_select %p353, %s18, 1
        %s355 = smul.addr %s354, 8
        %s356 = scalar_lea.vmem %s1, %s355
      $region36: #{tpu_custom_call.1} parent=27 // pred_fallthru
        _
      // Predicated region
      $region37: #{tpu_custom_call.1} parent=27 // pred_check
        %p357 = pneg %p90
      $region38: #{tpu_custom_call.1} parent=27 // pred_check_branch
        %359 = sbr.rel (%p357) target = $region40
      $region39: #{tpu_custom_call.1} parent=27 // pred_region
        %p360 = scmp.lt.s32.totalorder %s18, 1
        %s361 = scalar_select %p360, %s18, 1
        %s362 = smul.addr %s361, 8
        %s363 = scalar_lea.vmem %s2, %s362
      $region40: #{tpu_custom_call.1} parent=27 // pred_fallthru
        _
      // Predicated region
      $region41: #{tpu_custom_call.1} parent=27 // pred_check
        %p364 = pneg %p116
      $region42: #{tpu_custom_call.1} parent=27 // pred_check_branch
        %366 = sbr.rel (%p364) target = $region44
      $region43: #{tpu_custom_call.1} parent=27 // pred_region
        %p367 = scmp.lt.s32.totalorder %s18, 1
        %s368 = scalar_select %p367, %s18, 1
        %s369 = smul.addr %s368, 8
        %s370 = scalar_lea.vmem %s3, %s369
      $region44: #{tpu_custom_call.1} parent=27 // pred_fallthru
        _
      // Predicated region
      $region45: #{tpu_custom_call.1} parent=27 // pred_check
        %p371 = pneg %p142
      $region46: #{tpu_custom_call.1} parent=27 // pred_check_branch
        %373 = sbr.rel (%p371) target = $region48
      $region47: #{tpu_custom_call.1} parent=27 // pred_region
        %p374 = scmp.lt.s32.totalorder %s18, 1
        %s375 = scalar_select %p374, %s18, 1
        %s376 = smul.addr %s375, 8
        %s377 = scalar_lea.vmem %s4, %s376
      $region48: #{tpu_custom_call.1} parent=27 // pred_fallthru
        _
      // Predicated region
      $region49: #{tpu_custom_call.1} parent=27 // pred_check
        %p378 = pneg %p168
      $region50: #{tpu_custom_call.1} parent=27 // pred_check_branch
        %380 = sbr.rel (%p378) target = $region52
      $region51: #{tpu_custom_call.1} parent=27 // pred_region
        %p381 = scmp.lt.s32.totalorder %s18, 1
        %s382 = scalar_select %p381, %s18, 1
        %s383 = smul.addr %s382, 8
        %s384 = scalar_lea.vmem %s5, %s383
      $region52: #{tpu_custom_call.1} parent=27 // pred_fallthru
        _
      // Predicated region
      $region53: #{tpu_custom_call.1} parent=27 // pred_check
        %p385 = pneg %p194
      $region54: #{tpu_custom_call.1} parent=27 // pred_check_branch
        %387 = sbr.rel (%p385) target = $region56
      $region55: #{tpu_custom_call.1} parent=27 // pred_region
        %p388 = scmp.lt.s32.totalorder %s18, 1
        %s389 = scalar_select %p388, %s18, 1
        %s390 = smul.addr %s389, 8
        %s391 = scalar_lea.vmem %s6, %s390
      $region56: #{tpu_custom_call.1} parent=27 // pred_fallthru
        _
    $region28: #{tpu_custom_call.1} parent=5 // pred_fallthru
      _
    %p392 = scmp.le.s32.totalorder 1, %s18
    %p393 = scmp.lt.s32.totalorder %s18, 3
    %p394 = pnand %p392, %p393
    %p395 = pneg %p394
    // Predicated region
    $region57: #{tpu_custom_call.1} parent=5 // pred_check
      _
    $region58: #{tpu_custom_call.1} parent=5 // pred_check_branch
      %397 = sbr.rel (%p394) target = $region60
    $region59: #{tpu_custom_call.1} parent=5 // pred_region
      %s398 = ssub.s32 %s18, 1
      %p399 = scmp.lt.s32.totalorder %s23, 1
      %s400 = scalar_select %p399, %s23, 1
      %s401 = smul.addr %s400, 8
      %s402 = scalar_lea.vmem %s0, %s401
      %p403 = pneg %p44
      %p404 = pneg %p41
      %p405 = scmp.lt.s32.totalorder %s23, 1
      %s406 = scalar_select %p405, %s23, 1
      %s407 = smul.addr %s406, 8
      %s408 = scalar_lea.vmem %s1, %s407
      %p409 = pneg %p70
      %p410 = pneg %p67
      %p411 = scmp.lt.s32.totalorder %s23, 1
      %s412 = scalar_select %p411, %s23, 1
      %s413 = smul.addr %s412, 8
      %s414 = scalar_lea.vmem %s2, %s413
      %p415 = pneg %p96
      %p416 = pneg %p93
      %p417 = scmp.lt.s32.totalorder %s23, 1
      %s418 = scalar_select %p417, %s23, 1
      %s419 = smul.addr %s418, 8
      %s420 = scalar_lea.vmem %s3, %s419
      %p421 = pneg %p122
      %p422 = pneg %p119
      %p423 = scmp.lt.s32.totalorder %s23, 1
      %s424 = scalar_select %p423, %s23, 1
      %s425 = smul.addr %s424, 8
      %s426 = scalar_lea.vmem %s4, %s425
      %p427 = pneg %p148
      %p428 = pneg %p145
      %p429 = scmp.lt.s32.totalorder %s23, 1
      %s430 = scalar_select %p429, %s23, 1
      %s431 = smul.addr %s430, 8
      %s432 = scalar_lea.vmem %s5, %s431
      %p433 = pneg %p174
      %p434 = pneg %p171
      %p435 = scmp.lt.s32.totalorder %s23, 1
      %s436 = scalar_select %p435, %s23, 1
      %s437 = smul.addr %s436, 8
      %s438 = scalar_lea.vmem %s6, %s437
      %p439 = pneg %p200
      %p440 = pneg %p197
      %p441 = pneg %p221
      %p442 = pneg %p218
      %p443 = pneg %p242
      %p444 = pneg %p239
      %p445 = pneg %p263
      %p446 = pneg %p260
      %p447 = pneg %p289
      %p448 = pneg %p286
      %p449 = scmp.lt.s32.totalorder %s23, 1
      %s450 = scalar_select %p449, %s23, 1
      %s451 = scalar_lea.vmem %s10, %s450
      %p452 = pneg %p315
      %p453 = pneg %p312
      %p454 = scmp.lt.s32.totalorder %s23, 1
      %s455 = scalar_select %p454, %s23, 1
      %s456 = scalar_lea.vmem %s11, %s455
      %p457 = scmp.lt.s32.totalorder %s23, 1
      %s458 = scalar_select %p457, %s23, 1
      %s459 = smul.addr %s458, 8
      %s460 = scalar_lea.vmem %s0, %s459
      %p461 = scmp.lt.s32.totalorder %s23, 1
      %s462 = scalar_select %p461, %s23, 1
      %s463 = smul.addr %s462, 8
      %s464 = scalar_lea.vmem %s1, %s463
      %p465 = scmp.lt.s32.totalorder %s23, 1
      %s466 = scalar_select %p465, %s23, 1
      %s467 = smul.addr %s466, 8
      %s468 = scalar_lea.vmem %s2, %s467
      %p469 = scmp.lt.s32.totalorder %s23, 1
      %s470 = scalar_select %p469, %s23, 1
      %s471 = smul.addr %s470, 8
      %s472 = scalar_lea.vmem %s3, %s471
      %p473 = scmp.lt.s32.totalorder %s23, 1
      %s474 = scalar_select %p473, %s23, 1
      %s475 = smul.addr %s474, 8
      %s476 = scalar_lea.vmem %s4, %s475
      %p477 = scmp.lt.s32.totalorder %s23, 1
      %s478 = scalar_select %p477, %s23, 1
      %s479 = smul.addr %s478, 8
      %s480 = scalar_lea.vmem %s5, %s479
      %p481 = scmp.lt.s32.totalorder %s23, 1
      %s482 = scalar_select %p481, %s23, 1
      %s483 = smul.addr %s482, 8
      %s484 = scalar_lea.vmem %s6, %s483
      %p485 = scmp.lt.s32.totalorder %s23, 1
      %s486 = scalar_select %p485, %s23, 1
      %s487 = scalar_lea.vmem %s10, %s486
      %p488 = scmp.lt.s32.totalorder %s23, 1
      %s489 = scalar_select %p488, %s23, 1
      %s490 = scalar_lea.vmem %s11, %s489
      %v492 = vld [vmem:[%s460] sm:$0xff]
      %v493 = vld [vmem:[%s464] sm:$0xff]
      %v494 = vld [vmem:[%s468] sm:$0xff]
      %v495 = vld [vmem:[%s472] sm:$0xff]
      %v496 = vld [vmem:[%s476] sm:$0xff]
      %v497 = vld [vmem:[%s480] sm:$0xff]
      %v498 = vld [vmem:[%s484] sm:$0xff]
      %v499 = vld [vmem:[%s7] sm:$0xff]
      %v500 = vld [vmem:[%s7 + $0x8] sm:$0xff]
      %v501 = vld [vmem:[%s7 + $0x10] sm:$0xff]
      %v502 = vld [vmem:[%s7 + $0x18] sm:$0xff]
      %v503 = vld [vmem:[%s7 + $0x20] sm:$0xff]
      %v504 = vld [vmem:[%s7 + $0x28] sm:$0xff]
      %v505 = vld [vmem:[%s7 + $0x30] sm:$0xff]
      %v506 = vld [vmem:[%s7 + $0x38] sm:$0xff]
      %v507 = vld [vmem:[%s7 + $0x40] sm:$0xff]
      %v508 = vld [vmem:[%s7 + $0x48] sm:$0xff]
      %v509 = vld [vmem:[%s7 + $0x50] sm:$0xff]
      %v510 = vld [vmem:[%s7 + $0x58] sm:$0xff]
      %v511 = vld [vmem:[%s7 + $0x60] sm:$0xff]
      %v512 = vld [vmem:[%s7 + $0x68] sm:$0xff]
      %v513 = vld [vmem:[%s7 + $0x70] sm:$0xff]
      %v514 = vld [vmem:[%s7 + $0x78] sm:$0xff]
      %v515 = vld [vmem:[%s8] sm:$0xff]
      %v516 = vld [vmem:[%s8 + $0x8] sm:$0xff]
      %v517 = vld [vmem:[%s8 + $0x10] sm:$0xff]
      %v518 = vld [vmem:[%s8 + $0x18] sm:$0xff]
      %v519 = vld [vmem:[%s8 + $0x20] sm:$0xff]
      %v520 = vld [vmem:[%s8 + $0x28] sm:$0xff]
      %v521 = vld [vmem:[%s8 + $0x30] sm:$0xff]
      %v522 = vld [vmem:[%s8 + $0x38] sm:$0xff]
      %v523 = vld [vmem:[%s8 + $0x40] sm:$0xff]
      %v524 = vld [vmem:[%s8 + $0x48] sm:$0xff]
      %v525 = vld [vmem:[%s8 + $0x50] sm:$0xff]
      %v526 = vld [vmem:[%s8 + $0x58] sm:$0xff]
      %v527 = vld [vmem:[%s8 + $0x60] sm:$0xff]
      %v528 = vld [vmem:[%s8 + $0x68] sm:$0xff]
      %v529 = vld [vmem:[%s8 + $0x70] sm:$0xff]
      %v530 = vld [vmem:[%s8 + $0x78] sm:$0xff]
      %v531 = vld [vmem:[%s9] sm:$0x1]
      %v532 = vcvt.s32.f32 %v493
      %v533 = vrcp.pop %v532
      %v534 = vmul.f32 1.0, %v533
      %v535 = vlaneseq
      %v536 = vand.u32 %v535, 127
      %537 = vset.pattern.permute.xlu0 0
      %538 = vperm.xlu0 %537, %v493
      %v539 = vpop.permute.xlu0 %538
      %vm540 = vcmp.lt.s32.totalorder %v536, %v539
      %v541 = vsel %vm540, 1, 0
      %v542 = vcvt.s32.f32 %v541
      %543 = vset.pattern.permute.xlu0 0
      %544 = vperm.xlu0 %543, %v492
      %v545 = vpop.permute.xlu0 %544
      %vm546 = vcmp.eq.s32.totalorder %v536, %v545
      %v547 = vsel %vm546, 1, 0
      %v548 = vcvt.s32.f32 %v547
      %550 = vset.pattern.permute.xlu0 0
      %551 = vperm.xlu0 %550, %v542
      %v552 = vpop.permute.xlu0 %551
      %v554 = vmul.f32 %v548, %v552
      %v555 = vadd.f32 %v554, 0.0
      %556 = vset.pattern.permute.xlu0 1
      %557 = vperm.xlu0 %556, %v492
      %v558 = vpop.permute.xlu0 %557
      %vm559 = vcmp.eq.s32.totalorder %v536, %v558
      %v560 = vsel %vm559, 1, 0
      %v561 = vcvt.s32.f32 %v560
      %562 = vset.pattern.permute.xlu0 1
      %563 = vperm.xlu0 %562, %v542
      %v564 = vpop.permute.xlu0 %563
      %v566 = vmul.f32 %v561, %v564
      %v567 = vadd.f32 %v555, %v566
      %568 = vset.pattern.permute.xlu0 2
      %569 = vperm.xlu0 %568, %v492
      %v570 = vpop.permute.xlu0 %569
      %vm571 = vcmp.eq.s32.totalorder %v536, %v570
      %v572 = vsel %vm571, 1, 0
      %v573 = vcvt.s32.f32 %v572
      %574 = vset.pattern.permute.xlu0 2
      %575 = vperm.xlu0 %574, %v542
      %v576 = vpop.permute.xlu0 %575
      %v578 = vmul.f32 %v573, %v576
      %v579 = vadd.f32 %v567, %v578
      %580 = vset.pattern.permute.xlu0 3
      %581 = vperm.xlu0 %580, %v492
      %v582 = vpop.permute.xlu0 %581
      %vm583 = vcmp.eq.s32.totalorder %v536, %v582
      %v584 = vsel %vm583, 1, 0
      %v585 = vcvt.s32.f32 %v584
      %586 = vset.pattern.permute.xlu0 3
      %587 = vperm.xlu0 %586, %v542
      %v588 = vpop.permute.xlu0 %587
      %v590 = vmul.f32 %v585, %v588
      %v591 = vadd.f32 %v579, %v590
      %592 = vset.pattern.permute.xlu0 4
      %593 = vperm.xlu0 %592, %v492
      %v594 = vpop.permute.xlu0 %593
      %vm595 = vcmp.eq.s32.totalorder %v536, %v594
      %v596 = vsel %vm595, 1, 0
      %v597 = vcvt.s32.f32 %v596
      %598 = vset.pattern.permute.xlu0 4
      %599 = vperm.xlu0 %598, %v542
      %v600 = vpop.permute.xlu0 %599
      %v602 = vmul.f32 %v597, %v600
      %v603 = vadd.f32 %v591, %v602
      %604 = vset.pattern.permute.xlu0 5
      %605 = vperm.xlu0 %604, %v492
      %v606 = vpop.permute.xlu0 %605
      %vm607 = vcmp.eq.s32.totalorder %v536, %v606
      %v608 = vsel %vm607, 1, 0
      %v609 = vcvt.s32.f32 %v608
      %610 = vset.pattern.permute.xlu0 5
      %611 = vperm.xlu0 %610, %v542
      %v612 = vpop.permute.xlu0 %611
      %v614 = vmul.f32 %v609, %v612
      %v615 = vadd.f32 %v603, %v614
      %616 = vset.pattern.permute.xlu0 6
      %617 = vperm.xlu0 %616, %v492
      %v618 = vpop.permute.xlu0 %617
      %vm619 = vcmp.eq.s32.totalorder %v536, %v618
      %v620 = vsel %vm619, 1, 0
      %v621 = vcvt.s32.f32 %v620
      %622 = vset.pattern.permute.xlu0 6
      %623 = vperm.xlu0 %622, %v542
      %v624 = vpop.permute.xlu0 %623
      %v626 = vmul.f32 %v621, %v624
      %v627 = vadd.f32 %v615, %v626
      %628 = vset.pattern.permute.xlu0 7
      %629 = vperm.xlu0 %628, %v492
      %v630 = vpop.permute.xlu0 %629
      %vm631 = vcmp.eq.s32.totalorder %v536, %v630
      %v632 = vsel %vm631, 1, 0
      %v633 = vcvt.s32.f32 %v632
      %634 = vset.pattern.permute.xlu0 7
      %635 = vperm.xlu0 %634, %v542
      %v636 = vpop.permute.xlu0 %635
      %v638 = vmul.f32 %v633, %v636
      %v639 = vadd.f32 %v627, %v638
      %641 = vset.pattern.permute.xlu0 0
      %642 = vperm.xlu0 %641, %v534
      %v643 = vpop.permute.xlu0 %642
      %v645 = vmul.f32 %v639, %v643
      %v646 = vpack.c.bf16 %v645, %v645
      %v647 = vpack.c.bf16 %v500, %v499
      %v648 = vpack.c.bf16 %v502, %v501
      %v649 = vpack.c.bf16 %v504, %v503
      %v650 = vpack.c.bf16 %v506, %v505
      %v651 = vpack.c.bf16 %v508, %v507
      %v652 = vpack.c.bf16 %v510, %v509
      %v653 = vpack.c.bf16 %v512, %v511
      %v654 = vpack.c.bf16 %v514, %v513
      %v655 = vpack.c.bf16 %v516, %v515
      %v656 = vpack.c.bf16 %v518, %v517
      %v657 = vpack.c.bf16 %v520, %v519
      %v658 = vpack.c.bf16 %v522, %v521
      %v659 = vpack.c.bf16 %v524, %v523
      %v660 = vpack.c.bf16 %v526, %v525
      %v661 = vpack.c.bf16 %v528, %v527
      %v662 = vpack.c.bf16 %v530, %v529
      %663 = vmatprep.subr.bf16.mxu0 0
      %664 = vmatpush1.bf16.msra.mxu0 %v647
      %665 = vmatprep.subr.bf16.mxu0 0
      %666 = vmatpush1.bf16.msra.mxu0 %v648
      %667 = vmatprep.subr.bf16.mxu0 0
      %668 = vmatpush1.bf16.msra.mxu0 %v649
      %669 = vmatprep.subr.bf16.mxu0 0
      %670 = vmatpush1.bf16.msra.mxu0 %v650
      %671 = vmatprep.subr.bf16.mxu0 0
      %672 = vmatpush1.bf16.msra.mxu0 %v651
      %673 = vmatprep.subr.bf16.mxu0 0
      %674 = vmatpush1.bf16.msra.mxu0 %v652
      %675 = vmatprep.subr.bf16.mxu0 0
      %676 = vmatpush1.bf16.msra.mxu0 %v653
      %677 = vmatprep.subr.bf16.mxu0 0
      %678 = vmatpush1.bf16.msra.mxu0 %v654
      %679 = vmatprep.subr.bf16.mxu0 0
      %680 = vmatpush1.bf16.msra.mxu0 0
      %681 = vmatprep.subr.bf16.mxu0 0
      %682 = vmatpush1.bf16.msra.mxu0 0
      %683 = vmatprep.subr.bf16.mxu0 0
      %684 = vmatpush1.bf16.msra.mxu0 0
      %685 = vmatprep.subr.bf16.mxu0 0
      %686 = vmatpush1.bf16.msra.mxu0 0
      %687 = vmatprep.subr.bf16.mxu0 0
      %688 = vmatpush1.bf16.msra.mxu0 0
      %689 = vmatprep.subr.bf16.mxu0 0
      %690 = vmatpush1.bf16.msra.mxu0 0
      %691 = vmatprep.subr.bf16.mxu0 0
      %692 = vmatpush1.bf16.msra.mxu0 0
      %693 = vmatprep.subr.bf16.mxu0 0
      %694 = vmatpush1.bf16.msra.mxu0 0
      %695 = vmatprep.mubr.bf16.mxu0 0
      %696 = vmatmul.mubr.bf16.gmra.mrb[0].mxu0 %v646
      %v697 = vpop.f32.mrb[0].mxu0
      %v698 = vadd.f32 0.0, %v697
      %v699 = vpop.f32.mrb[0].mxu0
      %v700 = vpop.f32.mrb[0].mxu0
      %v701 = vpop.f32.mrb[0].mxu0
      %702 = vdwg.mxu0
      %703 = vmatprep.subr.bf16.mxu0 0
      %704 = vmatpush1.bf16.msra.mxu0 %v655
      %705 = vmatprep.subr.bf16.mxu0 0
      %706 = vmatpush1.bf16.msra.mxu0 %v656
      %707 = vmatprep.subr.bf16.mxu0 0
      %708 = vmatpush1.bf16.msra.mxu0 %v657
      %709 = vmatprep.subr.bf16.mxu0 0
      %710 = vmatpush1.bf16.msra.mxu0 %v658
      %711 = vmatprep.subr.bf16.mxu0 0
      %712 = vmatpush1.bf16.msra.mxu0 %v659
      %713 = vmatprep.subr.bf16.mxu0 0
      %714 = vmatpush1.bf16.msra.mxu0 %v660
      %715 = vmatprep.subr.bf16.mxu0 0
      %716 = vmatpush1.bf16.msra.mxu0 %v661
      %717 = vmatprep.subr.bf16.mxu0 0
      %718 = vmatpush1.bf16.msra.mxu0 %v662
      %719 = vmatprep.subr.bf16.mxu0 0
      %720 = vmatpush1.bf16.msra.mxu0 0
      %721 = vmatprep.subr.bf16.mxu0 0
      %722 = vmatpush1.bf16.msra.mxu0 0
      %723 = vmatprep.subr.bf16.mxu0 0
      %724 = vmatpush1.bf16.msra.mxu0 0
      %725 = vmatprep.subr.bf16.mxu0 0
      %726 = vmatpush1.bf16.msra.mxu0 0
      %727 = vmatprep.subr.bf16.mxu0 0
      %728 = vmatpush1.bf16.msra.mxu0 0
      %729 = vmatprep.subr.bf16.mxu0 0
      %730 = vmatpush1.bf16.msra.mxu0 0
      %731 = vmatprep.subr.bf16.mxu0 0
      %732 = vmatpush1.bf16.msra.mxu0 0
      %733 = vmatprep.subr.bf16.mxu0 0
      %734 = vmatpush1.bf16.msra.mxu0 0
      %735 = vmatprep.mubr.bf16.mxu0 0
      %736 = vmatmul.mubr.bf16.gmra.mrb[0].mxu0 %v646
      %v737 = vpop.f32.mrb[0].mxu0
      %v738 = vadd.f32 0.0, %v737
      %v739 = vpop.f32.mrb[0].mxu0
      %v740 = vpop.f32.mrb[0].mxu0
      %v741 = vpop.f32.mrb[0].mxu0
      %742 = vdwg.mxu0
      %v743 = vpack.c.bf16 %v698, %v698
      %vm744 = vcmask 261120
      %v746 = vsel %vm744, %v743, 0
      %v749 = vsel %vm744, %v647, 0
      %v752 = vsel %vm744, %v648, 0
      %v755 = vsel %vm744, %v649, 0
      %v758 = vsel %vm744, %v650, 0
      %v761 = vsel %vm744, %v651, 0
      %v764 = vsel %vm744, %v652, 0
      %v767 = vsel %vm744, %v653, 0
      %v770 = vsel %vm744, %v654, 0
      %772 = vmatprep.subr.bf16.mxu0 0
      %773 = vmatpush1.bf16.xpose.msra.mxu0 %v749
      %774 = vmatprep.subr.bf16.mxu0 0
      %775 = vmatpush1.bf16.xpose.msra.mxu0 %v752
      %776 = vmatprep.subr.bf16.mxu0 0
      %777 = vmatpush1.bf16.xpose.msra.mxu0 %v755
      %778 = vmatprep.subr.bf16.mxu0 0
      %779 = vmatpush1.bf16.xpose.msra.mxu0 %v758
      %780 = vmatprep.subr.bf16.mxu0 0
      %781 = vmatpush1.bf16.xpose.msra.mxu0 %v761
      %782 = vmatprep.subr.bf16.mxu0 0
      %783 = vmatpush1.bf16.xpose.msra.mxu0 %v764
      %784 = vmatprep.subr.bf16.mxu0 0
      %785 = vmatpush1.bf16.xpose.msra.mxu0 %v767
      %786 = vmatprep.subr.bf16.mxu0 0
      %787 = vmatpush1.bf16.xpose.msra.mxu0 %v770
      %788 = vmatprep.subr.bf16.mxu0 0
      %789 = vmatpush1.bf16.xpose.msra.mxu0 0
      %790 = vmatprep.subr.bf16.mxu0 0
      %791 = vmatpush1.bf16.xpose.msra.mxu0 0
      %792 = vmatprep.subr.bf16.mxu0 0
      %793 = vmatpush1.bf16.xpose.msra.mxu0 0
      %794 = vmatprep.subr.bf16.mxu0 0
      %795 = vmatpush1.bf16.xpose.msra.mxu0 0
      %796 = vmatprep.subr.bf16.mxu0 0
      %797 = vmatpush1.bf16.xpose.msra.mxu0 0
      %798 = vmatprep.subr.bf16.mxu0 0
      %799 = vmatpush1.bf16.xpose.msra.mxu0 0
      %800 = vmatprep.subr.bf16.mxu0 0
      %801 = vmatpush1.bf16.xpose.msra.mxu0 0
      %802 = vmatprep.subr.bf16.mxu0 0
      %803 = vmatpush1.bf16.xpose.msra.mxu0 0
      %804 = vmatprep.mubr.bf16.mxu0 0
      %805 = vmatmul.mubr.bf16.gmra.mrb[0].mxu0 %v746
      %v806 = vpop.f32.mrb[0].mxu0
      %v807 = vadd.f32 0.0, %v806
      %v808 = vpop.f32.mrb[0].mxu0
      %v809 = vpop.f32.mrb[0].mxu0
      %v810 = vpop.f32.mrb[0].mxu0
      %811 = vdwg.mxu0
      %v812 = vpack.c.bf16 %v738, %v738
      %v814 = vsel %vm744, %v812, 0
      %v817 = vsel %vm744, %v655, 0
      %v820 = vsel %vm744, %v656, 0
      %v823 = vsel %vm744, %v657, 0
      %v826 = vsel %vm744, %v658, 0
      %v829 = vsel %vm744, %v659, 0
      %v832 = vsel %vm744, %v660, 0
      %v835 = vsel %vm744, %v661, 0
      %v838 = vsel %vm744, %v662, 0
      %840 = vmatprep.subr.bf16.mxu0 0
      %841 = vmatpush1.bf16.xpose.msra.mxu0 %v817
      %842 = vmatprep.subr.bf16.mxu0 0
      %843 = vmatpush1.bf16.xpose.msra.mxu0 %v820
      %844 = vmatprep.subr.bf16.mxu0 0
      %845 = vmatpush1.bf16.xpose.msra.mxu0 %v823
      %846 = vmatprep.subr.bf16.mxu0 0
      %847 = vmatpush1.bf16.xpose.msra.mxu0 %v826
      %848 = vmatprep.subr.bf16.mxu0 0
      %849 = vmatpush1.bf16.xpose.msra.mxu0 %v829
      %850 = vmatprep.subr.bf16.mxu0 0
      %851 = vmatpush1.bf16.xpose.msra.mxu0 %v832
      %852 = vmatprep.subr.bf16.mxu0 0
      %853 = vmatpush1.bf16.xpose.msra.mxu0 %v835
      %854 = vmatprep.subr.bf16.mxu0 0
      %855 = vmatpush1.bf16.xpose.msra.mxu0 %v838
      %856 = vmatprep.subr.bf16.mxu0 0
      %857 = vmatpush1.bf16.xpose.msra.mxu0 0
      %858 = vmatprep.subr.bf16.mxu0 0
      %859 = vmatpush1.bf16.xpose.msra.mxu0 0
      %860 = vmatprep.subr.bf16.mxu0 0
      %861 = vmatpush1.bf16.xpose.msra.mxu0 0
      %862 = vmatprep.subr.bf16.mxu0 0
      %863 = vmatpush1.bf16.xpose.msra.mxu0 0
      %864 = vmatprep.subr.bf16.mxu0 0
      %865 = vmatpush1.bf16.xpose.msra.mxu0 0
      %866 = vmatprep.subr.bf16.mxu0 0
      %867 = vmatpush1.bf16.xpose.msra.mxu0 0
      %868 = vmatprep.subr.bf16.mxu0 0
      %869 = vmatpush1.bf16.xpose.msra.mxu0 0
      %870 = vmatprep.subr.bf16.mxu0 0
      %871 = vmatpush1.bf16.xpose.msra.mxu0 0
      %872 = vmatprep.mubr.bf16.mxu0 0
      %873 = vmatmul.mubr.bf16.gmra.mrb[0].mxu0 %v814
      %v874 = vpop.f32.mrb[0].mxu0
      %v875 = vadd.f32 0.0, %v874
      %v876 = vpop.f32.mrb[0].mxu0
      %v877 = vpop.f32.mrb[0].mxu0
      %v878 = vpop.f32.mrb[0].mxu0
      %879 = vdwg.mxu0
      %880 = vset.pattern.permute.xlu0 0
      %881 = vperm.xlu0 %880, %v494
      %v882 = vpop.permute.xlu0 %881
      %vm883 = vcmp.eq.s32.totalorder %v536, %v882
      %v884 = vadd.f32 %v875, %v495
      %v885 = vsel %vm883, -1e+30, %v884
      %v886 = vsel %vm883, %v875, 0.0
      %887 = vadd.xlane.f32.xlu0 %v886
      %v888 = vpop.xlane.xlu0 %887
      %vm889 = vcmask 7168
      %890 = vst.msk [vmem:[#allocation2] sm:$0xff] %vm889, %v888
      %v891 = vsel %vm883, %v807, 0.0
      %892 = vadd.xlane.f32.xlu0 %v891
      %v893 = vpop.xlane.xlu0 %892
      %894 = vst.msk [vmem:[#allocation3] sm:$0xff] %vm889, %v893
      %895 = vmax.xlane.f32.xlu0 %v885
      %v896 = vpop.xlane.xlu0 %895
      %vm897 = vcmp.eq.f32.partialorder %v885, %v896
      %v898 = vsel %vm897, %v536, 128
      %v899 = vand.u32 %v898, 65535
      %v900 = vshra.s32 %v898, 16
      %v901 = vcvt.s32.f32 %v899
      %v902 = vcvt.s32.f32 %v900
      %903 = vmin.xlane.f32.xlu0 %v902
      %v904 = vpop.xlane.xlu0 %903
      %vm905 = vcmp.eq.f32.partialorder %v902, %v904
      %v906 = vsel %vm905, %v901, inf
      %907 = vmin.xlane.f32.xlu0 %v906
      %v908 = vpop.xlane.xlu0 %907
      %v909 = vcvt.f32.s32 %v908
      %v910 = vcvt.f32.s32 %v904
      %v911 = vshll.u32 %v910, 16
      %v912 = vadd.s32 %v911, %v909
      %vm913 = vcmp.eq.s32.totalorder %v536, %v912
      %v914 = vsel %vm913, %v875, 0.0
      %915 = vadd.xlane.f32.xlu0 %v914
      %v916 = vpop.xlane.xlu0 %915
      %vm917 = vcmask 15368
      %918 = vst.msk [vmem:[#allocation2] sm:$0xff] %vm917, %v916
      %v919 = vsel %vm913, %v807, 0.0
      %920 = vadd.xlane.f32.xlu0 %v919
      %v921 = vpop.xlane.xlu0 %920
      %922 = vst.msk [vmem:[#allocation3] sm:$0xff] %vm917, %v921
      %v923 = vsel %vm913, -1e+30, %v885
      %924 = vmax.xlane.f32.xlu0 %v923
      %v925 = vpop.xlane.xlu0 %924
      %vm926 = vcmp.eq.f32.partialorder %v923, %v925
      %v927 = vsel %vm926, %v536, 128
      %v928 = vand.u32 %v927, 65535
      %v929 = vshra.s32 %v927, 16
      %v930 = vcvt.s32.f32 %v928
      %v931 = vcvt.s32.f32 %v929
      %932 = vmin.xlane.f32.xlu0 %v931
      %v933 = vpop.xlane.xlu0 %932
      %vm934 = vcmp.eq.f32.partialorder %v931, %v933
      %v935 = vsel %vm934, %v930, inf
      %936 = vmin.xlane.f32.xlu0 %v935
      %v937 = vpop.xlane.xlu0 %936
      %v938 = vcvt.f32.s32 %v937
      %v939 = vcvt.f32.s32 %v933
      %v940 = vshll.u32 %v939, 16
      %v941 = vadd.s32 %v940, %v938
      %vm942 = vcmp.eq.s32.totalorder %v536, %v941
      %v943 = vsel %vm942, %v875, 0.0
      %944 = vadd.xlane.f32.xlu0 %v943
      %v945 = vpop.xlane.xlu0 %944
      %vm946 = vcmask 23568
      %947 = vst.msk [vmem:[#allocation2] sm:$0xff] %vm946, %v945
      %v948 = vsel %vm942, %v807, 0.0
      %949 = vadd.xlane.f32.xlu0 %v948
      %v950 = vpop.xlane.xlu0 %949
      %951 = vst.msk [vmem:[#allocation3] sm:$0xff] %vm946, %v950
      %v952 = vsel %vm942, -1e+30, %v923
      %953 = vmax.xlane.f32.xlu0 %v952
      %v954 = vpop.xlane.xlu0 %953
      %vm955 = vcmp.eq.f32.partialorder %v952, %v954
      %v956 = vsel %vm955, %v536, 128
      %v957 = vand.u32 %v956, 65535
      %v958 = vshra.s32 %v956, 16
      %v959 = vcvt.s32.f32 %v957
      %v960 = vcvt.s32.f32 %v958
      %961 = vmin.xlane.f32.xlu0 %v960
      %v962 = vpop.xlane.xlu0 %961
      %vm963 = vcmp.eq.f32.partialorder %v960, %v962
      %v964 = vsel %vm963, %v959, inf
      %965 = vmin.xlane.f32.xlu0 %v964
      %v966 = vpop.xlane.xlu0 %965
      %v967 = vcvt.f32.s32 %v966
      %v968 = vcvt.f32.s32 %v962
      %v969 = vshll.u32 %v968, 16
      %v970 = vadd.s32 %v969, %v967
      %vm971 = vcmp.eq.s32.totalorder %v536, %v970
      %v972 = vsel %vm971, %v875, 0.0
      %973 = vadd.xlane.f32.xlu0 %v972
      %v974 = vpop.xlane.xlu0 %973
      %vm975 = vcmask 31768
      %976 = vst.msk [vmem:[#allocation2] sm:$0xff] %vm975, %v974
      %v977 = vsel %vm971, %v807, 0.0
      %978 = vadd.xlane.f32.xlu0 %v977
      %v979 = vpop.xlane.xlu0 %978
      %980 = vst.msk [vmem:[#allocation3] sm:$0xff] %vm975, %v979
      %v981 = vsel %vm971, -1e+30, %v952
      %982 = vmax.xlane.f32.xlu0 %v981
      %v983 = vpop.xlane.xlu0 %982
      %vm984 = vcmp.eq.f32.partialorder %v981, %v983
      %v985 = vsel %vm984, %v536, 128
      %v986 = vand.u32 %v985, 65535
      %v987 = vshra.s32 %v985, 16
      %v988 = vcvt.s32.f32 %v986
      %v989 = vcvt.s32.f32 %v987
      %990 = vmin.xlane.f32.xlu0 %v989
      %v991 = vpop.xlane.xlu0 %990
      %vm992 = vcmp.eq.f32.partialorder %v989, %v991
      %v993 = vsel %vm992, %v988, inf
      %994 = vmin.xlane.f32.xlu0 %v993
      %v995 = vpop.xlane.xlu0 %994
      %v996 = vcvt.f32.s32 %v995
      %v997 = vcvt.f32.s32 %v991
      %v998 = vshll.u32 %v997, 16
      %v999 = vadd.s32 %v998, %v996
      %vm1000 = vcmp.eq.s32.totalorder %v536, %v999
      %v1001 = vsel %vm1000, %v875, 0.0
      %1002 = vadd.xlane.f32.xlu0 %v1001
      %v1003 = vpop.xlane.xlu0 %1002
      %vm1004 = vcmask 39968
      %1005 = vst.msk [vmem:[#allocation2] sm:$0xff] %vm1004, %v1003
      %v1006 = vsel %vm1000, %v807, 0.0
      %1007 = vadd.xlane.f32.xlu0 %v1006
      %v1008 = vpop.xlane.xlu0 %1007
      %1009 = vst.msk [vmem:[#allocation3] sm:$0xff] %vm1004, %v1008
      %v1010 = vsel %vm1000, -1e+30, %v981
      %1011 = vmax.xlane.f32.xlu0 %v1010
      %v1012 = vpop.xlane.xlu0 %1011
      %vm1013 = vcmp.eq.f32.partialorder %v1010, %v1012
      %v1014 = vsel %vm1013, %v536, 128
      %v1015 = vand.u32 %v1014, 65535
      %v1016 = vshra.s32 %v1014, 16
      %v1017 = vcvt.s32.f32 %v1015
      %v1018 = vcvt.s32.f32 %v1016
      %1019 = vmin.xlane.f32.xlu0 %v1018
      %v1020 = vpop.xlane.xlu0 %1019
      %vm1021 = vcmp.eq.f32.partialorder %v1018, %v1020
      %v1022 = vsel %vm1021, %v1017, inf
      %1023 = vmin.xlane.f32.xlu0 %v1022
      %v1024 = vpop.xlane.xlu0 %1023
      %v1025 = vcvt.f32.s32 %v1024
      %v1026 = vcvt.f32.s32 %v1020
      %v1027 = vshll.u32 %v1026, 16
      %v1028 = vadd.s32 %v1027, %v1025
      %vm1029 = vcmp.eq.s32.totalorder %v536, %v1028
      %v1030 = vsel %vm1029, %v875, 0.0
      %1031 = vadd.xlane.f32.xlu0 %v1030
      %v1032 = vpop.xlane.xlu0 %1031
      %vm1033 = vcmask 48168
      %1034 = vst.msk [vmem:[#allocation2] sm:$0xff] %vm1033, %v1032
      %v1035 = vsel %vm1029, %v807, 0.0
      %1036 = vadd.xlane.f32.xlu0 %v1035
      %v1037 = vpop.xlane.xlu0 %1036
      %1038 = vst.msk [vmem:[#allocation3] sm:$0xff] %vm1033, %v1037
      %v1039 = vld [vmem:[#allocation2] sm:$0xff]
      %v1040 = vld [vmem:[#allocation3] sm:$0xff]
      %vm1041 = vcmask 48128
      %v1042 = vsel %vm1041, %v1039, -inf
      %1043 = vmax.xlane.f32.xlu0 %v1042
      %v1044 = vpop.xlane.xlu0 %1043
      %v1045 = vsub.f32 %v1039, %v1044
      %v1046 = vmul.f32 %v1045, 1.442695
      %v1047 = vpow.pop %v1046
      %v1048 = vsel %vm1041, %v1047, 0.0
      %1049 = vadd.xlane.f32.xlu0 %v1048
      %v1050 = vpop.xlane.xlu0 %1049
      %v1051 = vrcp.pop %v1050
      %v1052 = vmul.f32 %v1047, %v1051
      %v1053 = vsel %vm1041, %v1040, -inf
      %1054 = vmax.xlane.f32.xlu0 %v1053
      %v1055 = vpop.xlane.xlu0 %1054
      %v1056 = vsub.f32 %v1040, %v1055
      %v1057 = vmul.f32 %v1056, 1.442695
      %v1058 = vpow.pop %v1057
      %v1059 = vsel %vm1041, %v1058, 0.0
      %1060 = vadd.xlane.f32.xlu0 %v1059
      %v1061 = vpop.xlane.xlu0 %1060
      %v1062 = vrcp.pop %v1061
      %v1063 = vmul.f32 %v1058, %v1062
      %v1064 = vmul.f32 %v1052, 5.0
      %v1065 = vadd.f32 %v1064, %v1063
      %v1066 = vadd.f32 %v1065, 1e-06
      %v1067 = vrcp.pop %v1066
      %v1068 = vmul.f32 %v1063, %v1067
      %v1069 = vmul.f32 %v1052, %v1067
      %vm1070 = vcmp.eq.s32.totalorder %v536, 0
      %v1071 = vsel %vm1070, %v1068, %v1069
      %v1072 = vlog2.pop %v1071
      %v1073 = vmul.f32 %v1072, 0.6931472
      %v1074 = vsel %vm1041, %v1073, 0.0
      %1075 = vadd.xlane.f32.xlu0 %v1074
      %v1076 = vpop.xlane.xlu0 %1075
      %v1077 = vrot.slane %v1076, 4
      %v1078 = vadd.f32 %v1076, %v1077
      %v1079 = vrot.slane %v1078, 2
      %v1080 = vadd.f32 %v1078, %v1079
      %v1081 = vrot.slane %v1080, 1
      %v1082 = vadd.f32 %v1080, %v1081
      %s1083 = vtos %v1082
      %v1085 = vlaneseq
      %v1086 = vshrl.u32 %v1085, 7
      %v1087 = vsub.s32 0, %v1086
      %v1088 = vrot.slane %v531, %v1087
      %v1090 = vmul.f32 %v698, %v1088
      %v1091 = vsel %vm744, %v1090, 0.0
      %1092 = vadd.xlane.f32.xlu0 %v1091
      %v1093 = vpop.xlane.xlu0 %1092
      %v1094 = vmul.f32 %v497, %v542
      %vm1095 = vcmask 64512
      %v1096 = vsel %vm1095, %v1094, 0.0
      %1097 = vadd.xlane.f32.xlu0 %v1096
      %v1098 = vpop.xlane.xlu0 %1097
      %v1099 = vmul.f32 %v1098, %v534
      %v1100 = vadd.f32 %v1093, %v1099
      %v1101 = vsub.s32 %v493, 1
      %1102 = vset.pattern.permute.xlu0 0
      %1103 = vperm.xlu0 %1102, %v1101
      %v1104 = vpop.permute.xlu0 %1103
      %vm1105 = vcmp.eq.s32.totalorder %v536, %v1104
      %v1106 = vsel %vm1105, 1, 0
      %v1107 = vcvt.s32.f32 %v1106
      %v1108 = vmul.f32 %v496, %v1107
      %v1109 = vsel %vm1095, %v1108, 0.0
      %1110 = vadd.xlane.f32.xlu0 %v1109
      %v1111 = vpop.xlane.xlu0 %1110
      %v1112 = vsub.f32 %v498, %v1111
      %v1113 = vsub.f32 %v1100, %v1112
      %v1114 = vrcp.pop 4320.0
      %v1115 = vmul.f32 %v1113, %v1114
      %v1116 = vmul.f32 %v1115, %v1115
      %v1117 = vsel %vm889, %v1116, 0.0
      %1118 = vadd.xlane.f32.xlu0 %v1117
      %v1119 = vpop.xlane.xlu0 %1118
      %v1120 = vrot.slane %v1119, 4
      %v1121 = vadd.f32 %v1119, %v1120
      %v1122 = vrot.slane %v1121, 2
      %v1123 = vadd.f32 %v1121, %v1122
      %v1124 = vrot.slane %v1123, 1
      %v1125 = vadd.f32 %v1123, %v1124
      %s1126 = vtos %v1125
      %v1127 = vstv %s1083
      %vm1128 = vcmask 0
      %1129 = vst.msk [vmem:[%s487] sm:$0x1] %vm1128, %v1127
      %v1130 = vstv %s1126
      %1131 = vst.msk [vmem:[%s490] sm:$0x1] %vm1128, %v1130
      %p1132 = scmp.lt.s32.totalorder %s23, 1
      %s1133 = scalar_select %p1132, %s23, 1
      %s1134 = scalar_lea.vmem %s10, %s1133
      %p1135 = scmp.lt.s32.totalorder %s23, 1
      %s1136 = scalar_select %p1135, %s23, 1
      %s1137 = scalar_lea.vmem %s11, %s1136
      // Predicated region
      $region61: #{tpu_custom_call.1} parent=59 // pred_check
        %p1138 = pneg %p286
      $region62: #{tpu_custom_call.1} parent=59 // pred_check_branch
        %1140 = sbr.rel (%p1138) target = $region64
      $region63: #{tpu_custom_call.1} parent=59 // pred_region
        _
      $region64: #{tpu_custom_call.1} parent=59 // pred_fallthru
        _
      // Predicated region
      $region65: #{tpu_custom_call.1} parent=59 // pred_check
        %p1141 = pneg %p312
      $region66: #{tpu_custom_call.1} parent=59 // pred_check_branch
        %1143 = sbr.rel (%p1141) target = $region68
      $region67: #{tpu_custom_call.1} parent=59 // pred_region
        _
      $region68: #{tpu_custom_call.1} parent=59 // pred_fallthru
        _
    $region60: #{tpu_custom_call.1} parent=5 // pred_fallthru
      _
    %p1144 = scmp.le.s32.totalorder 2, %s18
    // Predicated region
    $region69: #{tpu_custom_call.1} parent=5 // pred_check
      %p1145 = pneg %p1144
    $region70: #{tpu_custom_call.1} parent=5 // pred_check_branch
      %1147 = sbr.rel (%p1145) target = $region72
    $region71: #{tpu_custom_call.1} parent=5 // pred_region
      %s1148 = ssub.s32 %s18, 2
      // Predicated region
      $region73: #{tpu_custom_call.1} parent=71 // pred_check
        %p1149 = pneg %p292
      $region74: #{tpu_custom_call.1} parent=71 // pred_check_branch
        %1151 = sbr.rel (%p1149) target = $region76
      $region75: #{tpu_custom_call.1} parent=71 // pred_region
        %p1152 = scmp.lt.s32.totalorder %s24, 1
        %s1153 = scalar_select %p1152, %s24, 1
        %s1154 = scalar_lea.vmem %s10, %s1153
      $region76: #{tpu_custom_call.1} parent=71 // pred_fallthru
        _
      // Predicated region
      $region77: #{tpu_custom_call.1} parent=71 // pred_check
        %p1155 = pneg %p318
      $region78: #{tpu_custom_call.1} parent=71 // pred_check_branch
        %1157 = sbr.rel (%p1155) target = $region80
      $region79: #{tpu_custom_call.1} parent=71 // pred_region
        %p1158 = scmp.lt.s32.totalorder %s24, 1
        %s1159 = scalar_select %p1158, %s24, 1
        %s1160 = scalar_lea.vmem %s11, %s1159
      $region80: #{tpu_custom_call.1} parent=71 // pred_fallthru
        _
    $region72: #{tpu_custom_call.1} parent=5 // pred_fallthru
      _
  $region6: #{tpu_custom_call.1} parent=0 // loop_footer
    %s22 = sadd.s32 1, %s18
  $region7: #{tpu_custom_call.1} parent=0 // loop_footer_branch
    %17 = sbr.rel target = $region3
  $region8: #{tpu_custom_call.1} parent=0 // loop_exit
    _

</llo_original>
